<compile_context>
chip_gen: v7x
topology: tpu7x:2x2x1
jax: 0.10.0
libtpu: 0.0.40
codegen_flags: <defaults>
</compile_context>

<pallas_src>
import functools

import jax
import jax.numpy as jnp
import numpy as np
from jax import lax
from jax.experimental import pallas as pl
from jax.experimental.pallas import tpu as pltpu

EPS = 1e-5


# ---------------------------------------------------------------------------
# Shared helper: tap-packed 3x3 conv on one (th, W) row tile.
# ---------------------------------------------------------------------------
def _conv_tap_packed(xp_ref, w_ref, th, out_w):
    """Returns the f32 conv output of this row tile, shape (th*out_w, Cpad)."""
    row0 = pl.program_id(1) * th
    patches = []
    for ky in range(3):
        for kx in range(3):
            # shifted (th, W, Cin) window; halo comes from the zero padding
            patches.append(xp_ref[0, pl.ds(row0 + ky, th), pl.ds(kx, out_w), :])
    lhs = jnp.concatenate(patches, axis=-1)            # (th, W, 9*Cin) bf16
    lhs = lhs.reshape(th * out_w, lhs.shape[-1])       # (rows, 9*Cin)
    # one MXU matmul with K = 9*Cin, N = Cpad (lane-dense)
    return jnp.dot(lhs, w_ref[...], preferred_element_type=jnp.float32)


# ---------------------------------------------------------------------------
# Pass 1: conv (tap-packed) -> per-image BN partials (sum, sumsq), accumulated
# in a VMEM-resident output block across the h axis.
# ---------------------------------------------------------------------------
def _stats_kernel(xp_ref, w_ref, stats_ref, *, th, out_w):
    # xp_ref:    (1, H+2, W+2, Cin) bf16
    # w_ref:     (9*Cin, Cpad)      bf16
    # stats_ref: (1, 8, Cpad)       f32   rows: [sum, sumsq, 0...]
    conv = _conv_tap_packed(xp_ref, w_ref, th, out_w)  # (rows, Cpad) f32

    @pl.when(pl.program_id(1) == 0)
    def _():
        stats_ref[...] = jnp.zeros_like(stats_ref)

    s = jnp.sum(conv, axis=0, keepdims=True)
    sq = jnp.sum(conv * conv, axis=0, keepdims=True)
    upd = jnp.concatenate(
        [s, sq, jnp.zeros((6, s.shape[-1]), jnp.float32)], axis=0)  # (8, Cpad)
    stats_ref[0] += upd


# ---------------------------------------------------------------------------
# Pass 2: recompute conv, fuse BN affine (pre-folded scale/shift) + ReLU.
# ---------------------------------------------------------------------------
def _conv_bn_relu_kernel(xp_ref, w_ref, scale_ref, shift_ref, o_ref, *, th, out_w):
    # o_ref: (1, th, W, Cpad) bf16  (lane-dense NHWC output tile)
    conv = _conv_tap_packed(xp_ref, w_ref, th, out_w)  # (rows, Cpad) f32
    y = jnp.maximum(conv * scale_ref[...] + shift_ref[...], 0.0)
    o_ref[0] = y.reshape(th, out_w, y.shape[-1]).astype(o_ref.dtype)


# ---------------------------------------------------------------------------
# Tile picker (trace-time Python on static shapes)
# ---------------------------------------------------------------------------
def _round_up(x, m):
    return (x + m - 1) // m * m


def _pick_row_tile(h, w, max_rows=2048):
    cands = [t for t in range(1, h + 1)
             if h % t == 0 and (t * w) % 8 == 0 and t * w <= max_rows]
    if not cands:
        # Safe fallback: the output block keeps full W / Cpad dims, so th = H
        # never violates the (8, 128) BlockSpec constraint.
        return h
    multi = [t for t in cands if h // t >= 2]
    return max(multi) if multi else max(cands)


# ---------------------------------------------------------------------------
# Wrapper
# ---------------------------------------------------------------------------
@jax.jit
def conv_batch_norm(x_nchw, weight, bias, gamma, beta):
    """x_nchw: (N, Cin, H, W); weight: (Cout, Cin, 3, 3). Returns (N, Cout, H, W) f32."""
    N, Cin, H, W = x_nchw.shape
    Cout = weight.shape[0]
    Cpad = _round_up(Cout, 128)   # lane-dense output channels
    # TODO(synk): on v6e/v7x with Cout > 128, padding to 256 would better fill
    # the 2x256x256 MXU; kept generation-agnostic here.

    # ---- glue: NCHW -> NHWC, zero-pad spatial, bf16 for the MXU ----
    x_nhwc = jnp.transpose(x_nchw, (0, 2, 3, 1)).astype(jnp.bfloat16)
    xp = jnp.pad(x_nhwc, ((0, 0), (1, 1), (1, 1), (0, 0)))       # (N, H+2, W+2, Cin)

    # weight (Cout, Cin, 3, 3) -> taps packed into K: (9*Cin, Cpad)
    wpack = jnp.transpose(weight, (2, 3, 1, 0)).reshape(9 * Cin, Cout)
    wpack = jnp.pad(wpack, ((0, 0), (0, Cpad - Cout))).astype(jnp.bfloat16)

    # Conv bias cancels under training-mode BN (mean absorbs it, variance is
    # unchanged), so it is never materialized in the kernels.
    del bias

    th = _pick_row_tile(H, W)
    grid_h = H // th

    # ---- pass 1: global BN partial statistics (stats-only, no conv writeback) ----
    stats = pl.pallas_call(
        functools.partial(_stats_kernel, th=th, out_w=W),
        out_shape=jax.ShapeDtypeStruct((N, 8, Cpad), jnp.float32),
        grid=(N, grid_h),
        in_specs=[
            pl.BlockSpec((1, H + 2, W + 2, Cin), lambda n, h: (n, 0, 0, 0)),
            pl.BlockSpec((9 * Cin, Cpad), lambda n, h: (0, 0)),
        ],
        out_specs=pl.BlockSpec((1, 8, Cpad), lambda n, h: (n, 0, 0)),
        compiler_params=pltpu.CompilerParams(
            dimension_semantics=("parallel", "arbitrary"),
            vmem_limit_bytes=48 * 1024 * 1024,
        ),
    )(xp, wpack)

    # ---- glue: fold global batch statistics into per-channel scale/shift ----
    sums = jnp.sum(stats, axis=0)                        # (8, Cpad)
    count = jnp.float32(N * H * W)
    mean = sums[0] / count
    var = jnp.maximum(sums[1] / count - mean * mean, 0.0)   # biased variance
    inv_std = lax.rsqrt(var + EPS)
    gpad = jnp.pad(gamma.astype(jnp.float32), (0, Cpad - Cout))
    bpad = jnp.pad(beta.astype(jnp.float32), (0, Cpad - Cout))
    scale = (gpad * inv_std).reshape(1, Cpad)
    shift = (bpad - mean * gpad * inv_std).reshape(1, Cpad)

    # ---- pass 2: recompute conv fused with BN + ReLU (lane-dense NHWC store) ----
    out_nhwc = pl.pallas_call(
        functools.partial(_conv_bn_relu_kernel, th=th, out_w=W),
        out_shape=jax.ShapeDtypeStruct((N, H, W, Cpad), jnp.bfloat16),
        grid=(N, grid_h),
        in_specs=[
            pl.BlockSpec((1, H + 2, W + 2, Cin), lambda n, h: (n, 0, 0, 0)),
            pl.BlockSpec((9 * Cin, Cpad), lambda n, h: (0, 0)),
            pl.BlockSpec((1, Cpad), lambda n, h: (0, 0)),
            pl.BlockSpec((1, Cpad), lambda n, h: (0, 0)),
        ],
        out_specs=pl.BlockSpec((1, th, W, Cpad), lambda n, h: (n, h, 0, 0)),
        compiler_params=pltpu.CompilerParams(
            dimension_semantics=("parallel", "parallel"),
            vmem_limit_bytes=48 * 1024 * 1024,
        ),
    )(xp, wpack, scale, shift)

    # ---- glue: drop channel padding, back to NCHW f32 (module interface) ----
    # TODO(synk): a fused consumer could take the NHWC bf16 slab directly and
    # skip this extra HBM pass.
    out = out_nhwc[:, :, :, :Cout].astype(jnp.float32)
    return jnp.transpose(out, (0, 3, 1, 2))


# ---------------------------------------------------------------------------
# Pure-JAX f32 reference (PyTorch training-mode Conv->BN->ReLU semantics)
# ---------------------------------------------------------------------------
def reference(x_nchw, weight, bias, gamma, beta):
    out = lax.conv_general_dilated(
        x_nchw.astype(jnp.float32), weight.astype(jnp.float32),
        window_strides=(1, 1), padding="SAME",
        dimension_numbers=("NCHW", "OIHW", "NCHW"))
    out = out + bias.reshape(1, -1, 1, 1)
    mean = jnp.mean(out, axis=(0, 2, 3), keepdims=True)
    var = jnp.mean((out - mean) ** 2, axis=(0, 2, 3), keepdims=True)
    y = (out - mean) / jnp.sqrt(var + EPS)
    y = y * gamma.reshape(1, -1, 1, 1) + beta.reshape(1, -1, 1, 1)
    return jnp.maximum(y, 0.0)


if __name__ == "__main__":
    # small shapes consistent with ConvBatchNorm(in_channels=4, out_channels=8)
    N, Cin, H, W = 2, 4, 16, 16
    Cout = 8

    key = jax.random.PRNGKey(0)
    kx, kw, kb, kg, kbt = jax.random.split(key, 5)

    x = jax.random.normal(kx, (N, Cin, H, W), dtype=jnp.float32)

    fan_in = Cin * 3 * 3
    bound = 1.0 / np.sqrt(fan_in)
    weight = jax.random.uniform(kw, (Cout, Cin, 3, 3), jnp.float32, -bound, bound)
    bias = jax.random.uniform(kb, (Cout,), jnp.float32, -bound, bound)
    gamma = 1.0 + 0.1 * jax.random.normal(kg, (Cout,), jnp.float32)
    beta = 0.1 * jax.random.normal(kbt, (Cout,), jnp.float32)

    out = jax.block_until_ready(conv_batch_norm(x, weight, bias, gamma, beta))
    ref = jax.block_until_ready(reference(x, weight, bias, gamma, beta))

    assert out.shape == (N, Cout, H, W)
    # bf16 MXU operands + bf16 writeback => a few 1e-3 of error vs f32 reference
    np.testing.assert_allclose(np.asarray(out), np.asarray(ref), rtol=2e-2, atol=2e-2)

    print("KERNEL_OK")
</pallas_src>

<mosaic_0001>
module attributes {stable_mosaic.version = 11 : i64} {
  func.func @_stats_kernel(%arg0: i32, %arg1: i32, %arg2: memref<1x18x18x4xbf16, #tpu.memory_space<vmem>>, %arg3: memref<36x128xbf16, #tpu.memory_space<vmem>>, %arg4: memref<1x8x128xf32, #tpu.memory_space<vmem>>) attributes {dimension_semantics = [#tpu.dimension_semantics<parallel>, #tpu.dimension_semantics<arbitrary>], iteration_bounds = array<i64: 2, 2>, scalar_prefetch = 0 : i64, scratch_operands = 0 : i64, tpu.core_type = #tpu.core_type<tc>, window_params = [{transform_indices = @transform_0, window_bounds = array<i64: 1, 18, 18, 4>}, {pipeline_mode = #tpu.pipeline_mode<synchronous>, transform_indices = @transform_1, window_bounds = array<i64: 36, 128>}, {transform_indices = @transform_2, window_bounds = array<i64: 1, 8, 128>}]} {
    %c8_i32 = arith.constant 8 : i32
    %0 = arith.muli %arg1, %c8_i32 : i32
    %c0_i32 = arith.constant 0 : i32
    %1 = arith.addi %0, %c0_i32 : i32
    %c0 = arith.constant 0 : index
    %2 = arith.index_cast %1 : i32 to index
    %c0_0 = arith.constant 0 : index
    %c0_1 = arith.constant 0 : index
    %3 = vector.load %arg2[%c0, %2, %c0_0, %c0_1] : memref<1x18x18x4xbf16, #tpu.memory_space<vmem>>, vector<1x8x16x4xbf16>
    %4 = vector.shape_cast %3 : vector<1x8x16x4xbf16> to vector<8x16x4xbf16>
    %c0_i32_2 = arith.constant 0 : i32
    %5 = arith.addi %0, %c0_i32_2 : i32
    %c0_3 = arith.constant 0 : index
    %6 = arith.index_cast %5 : i32 to index
    %c1 = arith.constant 1 : index
    %c0_4 = arith.constant 0 : index
    %7 = vector.load %arg2[%c0_3, %6, %c1, %c0_4] : memref<1x18x18x4xbf16, #tpu.memory_space<vmem>>, vector<1x8x16x4xbf16>
    %8 = vector.shape_cast %7 : vector<1x8x16x4xbf16> to vector<8x16x4xbf16>
    %c0_i32_5 = arith.constant 0 : i32
    %9 = arith.addi %0, %c0_i32_5 : i32
    %c0_6 = arith.constant 0 : index
    %10 = arith.index_cast %9 : i32 to index
    %c2 = arith.constant 2 : index
    %c0_7 = arith.constant 0 : index
    %11 = vector.load %arg2[%c0_6, %10, %c2, %c0_7] : memref<1x18x18x4xbf16, #tpu.memory_space<vmem>>, vector<1x8x16x4xbf16>
    %12 = vector.shape_cast %11 : vector<1x8x16x4xbf16> to vector<8x16x4xbf16>
    %c1_i32 = arith.constant 1 : i32
    %13 = arith.addi %0, %c1_i32 : i32
    %c0_8 = arith.constant 0 : index
    %14 = arith.index_cast %13 : i32 to index
    %c0_9 = arith.constant 0 : index
    %c0_10 = arith.constant 0 : index
    %15 = vector.load %arg2[%c0_8, %14, %c0_9, %c0_10] : memref<1x18x18x4xbf16, #tpu.memory_space<vmem>>, vector<1x8x16x4xbf16>
    %16 = vector.shape_cast %15 : vector<1x8x16x4xbf16> to vector<8x16x4xbf16>
    %c1_i32_11 = arith.constant 1 : i32
    %17 = arith.addi %0, %c1_i32_11 : i32
    %c0_12 = arith.constant 0 : index
    %18 = arith.index_cast %17 : i32 to index
    %c1_13 = arith.constant 1 : index
    %c0_14 = arith.constant 0 : index
    %19 = vector.load %arg2[%c0_12, %18, %c1_13, %c0_14] : memref<1x18x18x4xbf16, #tpu.memory_space<vmem>>, vector<1x8x16x4xbf16>
    %20 = vector.shape_cast %19 : vector<1x8x16x4xbf16> to vector<8x16x4xbf16>
    %c1_i32_15 = arith.constant 1 : i32
    %21 = arith.addi %0, %c1_i32_15 : i32
    %c0_16 = arith.constant 0 : index
    %22 = arith.index_cast %21 : i32 to index
    %c2_17 = arith.constant 2 : index
    %c0_18 = arith.constant 0 : index
    %23 = vector.load %arg2[%c0_16, %22, %c2_17, %c0_18] : memref<1x18x18x4xbf16, #tpu.memory_space<vmem>>, vector<1x8x16x4xbf16>
    %24 = vector.shape_cast %23 : vector<1x8x16x4xbf16> to vector<8x16x4xbf16>
    %c2_i32 = arith.constant 2 : i32
    %25 = arith.addi %0, %c2_i32 : i32
    %c0_19 = arith.constant 0 : index
    %26 = arith.index_cast %25 : i32 to index
    %c0_20 = arith.constant 0 : index
    %c0_21 = arith.constant 0 : index
    %27 = vector.load %arg2[%c0_19, %26, %c0_20, %c0_21] : memref<1x18x18x4xbf16, #tpu.memory_space<vmem>>, vector<1x8x16x4xbf16>
    %28 = vector.shape_cast %27 : vector<1x8x16x4xbf16> to vector<8x16x4xbf16>
    %c2_i32_22 = arith.constant 2 : i32
    %29 = arith.addi %0, %c2_i32_22 : i32
    %c0_23 = arith.constant 0 : index
    %30 = arith.index_cast %29 : i32 to index
    %c1_24 = arith.constant 1 : index
    %c0_25 = arith.constant 0 : index
    %31 = vector.load %arg2[%c0_23, %30, %c1_24, %c0_25] : memref<1x18x18x4xbf16, #tpu.memory_space<vmem>>, vector<1x8x16x4xbf16>
    %32 = vector.shape_cast %31 : vector<1x8x16x4xbf16> to vector<8x16x4xbf16>
    %c2_i32_26 = arith.constant 2 : i32
    %33 = arith.addi %0, %c2_i32_26 : i32
    %c0_27 = arith.constant 0 : index
    %34 = arith.index_cast %33 : i32 to index
    %c2_28 = arith.constant 2 : index
    %c0_29 = arith.constant 0 : index
    %35 = vector.load %arg2[%c0_27, %34, %c2_28, %c0_29] : memref<1x18x18x4xbf16, #tpu.memory_space<vmem>>, vector<1x8x16x4xbf16>
    %36 = vector.shape_cast %35 : vector<1x8x16x4xbf16> to vector<8x16x4xbf16>
    %37 = tpu.concatenate %4, %8, %12, %16, %20, %24, %28, %32, %36 in 2 : vector<8x16x4xbf16>, vector<8x16x4xbf16>, vector<8x16x4xbf16>, vector<8x16x4xbf16>, vector<8x16x4xbf16>, vector<8x16x4xbf16>, vector<8x16x4xbf16>, vector<8x16x4xbf16>, vector<8x16x4xbf16> -> vector<8x16x36xbf16>
    %38 = vector.shape_cast %37 : vector<8x16x36xbf16> to vector<128x36xbf16>
    %c0_30 = arith.constant 0 : index
    %c0_31 = arith.constant 0 : index
    %39 = vector.load %arg3[%c0_30, %c0_31] : memref<36x128xbf16, #tpu.memory_space<vmem>>, vector<36x128xbf16>
    %cst = arith.constant dense<0.000000e+00> : vector<128x128xf32>
    %40 = tpu.matmul %38, %39, %cst {dimension_numbers = #tpu.dot_dimension_numbers<[1], [0], [0], [1], [0, 0, 1, 1], [], []>} : vector<128x36xbf16>, vector<36x128xbf16>, vector<128x128xf32> -> vector<128x128xf32>
    %c0_i32_32 = arith.constant 0 : i32
    %41 = arith.cmpi eq, %arg1, %c0_i32_32 : i32
    %42 = arith.extui %41 : i1 to i32
    %c0_i32_33 = arith.constant 0 : i32
    %43 = arith.cmpi ne, %42, %c0_i32_33 : i32
    scf.if %43 {
      %cst_43 = arith.constant 0.000000e+00 : f32
      %57 = vector.broadcast %cst_43 : f32 to vector<1x8x128xf32>
      %c0_44 = arith.constant 0 : index
      %c0_45 = arith.constant 0 : index
      %c0_46 = arith.constant 0 : index
      %58 = vector.load %arg4[%c0_44, %c0_45, %c0_46] : memref<1x8x128xf32, #tpu.memory_space<vmem>>, vector<1x8x128xf32>
      tpu.vector_store %arg4[%c0_44, %c0_45, %c0_46], %57 {strides = array<i32>} : memref<1x8x128xf32, #tpu.memory_space<vmem>>, vector<1x8x128xf32>,
    } else {
    }
    %cst_34 = arith.constant dense<0.000000e+00> : vector<128xf32>
    %44 = vector.multi_reduction <add>, %40, %cst_34 [0] : vector<128x128xf32> to vector<128xf32>
    %45 = vector.shape_cast %44 : vector<128xf32> to vector<1x128xf32>
    %46 = arith.mulf %40, %40 : vector<128x128xf32>
    %cst_35 = arith.constant dense<0.000000e+00> : vector<128xf32>
    %47 = vector.multi_reduction <add>, %46, %cst_35 [0] : vector<128x128xf32> to vector<128xf32>
    %48 = vector.shape_cast %47 : vector<128xf32> to vector<1x128xf32>
    %cst_36 = arith.constant 0.000000e+00 : f32
    %49 = vector.broadcast %cst_36 : f32 to vector<6x128xf32>
    %50 = tpu.concatenate %45, %48, %49 in 0 : vector<1x128xf32>, vector<1x128xf32>, vector<6x128xf32> -> vector<8x128xf32>
    %c0_37 = arith.constant 0 : index
    %c0_38 = arith.constant 0 : index
    %c0_39 = arith.constant 0 : index
    %51 = vector.load %arg4[%c0_37, %c0_38, %c0_39] : memref<1x8x128xf32, #tpu.memory_space<vmem>>, vector<1x8x128xf32>
    %52 = vector.shape_cast %51 : vector<1x8x128xf32> to vector<8x128xf32>
    %53 = arith.addf %52, %50 : vector<8x128xf32>
    %c0_40 = arith.constant 0 : index
    %c0_41 = arith.constant 0 : index
    %c0_42 = arith.constant 0 : index
    %54 = vector.load %arg4[%c0_40, %c0_41, %c0_42] : memref<1x8x128xf32, #tpu.memory_space<vmem>>, vector<1x8x128xf32>
    %55 = vector.shape_cast %54 : vector<1x8x128xf32> to vector<8x128xf32>
    %56 = vector.shape_cast %53 : vector<8x128xf32> to vector<1x8x128xf32>
    tpu.vector_store %arg4[%c0_40, %c0_41, %c0_42], %56 {strides = array<i32>} : memref<1x8x128xf32, #tpu.memory_space<vmem>>, vector<1x8x128xf32>,
    return
  }
  func.func @transform_0(%arg0: i32, %arg1: i32) -> (i32, i32, i32, i32) {
    %c0_i32 = arith.constant 0 : i32
    %c0_i32_0 = arith.constant 0 : i32
    %c0_i32_1 = arith.constant 0 : i32
    %c0_i32_2 = arith.constant 0 : i32
    return %arg0, %c0_i32, %c0_i32_0, %c0_i32_1 : i32, i32, i32, i32
  }
  func.func @transform_1(%arg0: i32, %arg1: i32) -> (i32, i32) {
    %c0_i32 = arith.constant 0 : i32
    %c0_i32_0 = arith.constant 0 : i32
    %c0_i32_1 = arith.constant 0 : i32
    return %c0_i32, %c0_i32_0 : i32, i32
  }
  func.func @transform_2(%arg0: i32, %arg1: i32) -> (i32, i32, i32) {
    %c0_i32 = arith.constant 0 : i32
    %c0_i32_0 = arith.constant 0 : i32
    %c0_i32_1 = arith.constant 0 : i32
    return %arg0, %c0_i32, %c0_i32_0 : i32, i32, i32
  }
}

module attributes {stable_mosaic.version = 11 : i64} {
  func.func @_conv_bn_relu_kernel(%arg0: i32, %arg1: i32, %arg2: memref<1x18x18x4xbf16, #tpu.memory_space<vmem>>, %arg3: memref<36x128xbf16, #tpu.memory_space<vmem>>, %arg4: memref<1x128xf32, #tpu.memory_space<vmem>>, %arg5: memref<1x128xf32, #tpu.memory_space<vmem>>, %arg6: memref<1x8x16x128xbf16, #tpu.memory_space<vmem>>) attributes {dimension_semantics = [#tpu.dimension_semantics<parallel>, #tpu.dimension_semantics<parallel>], iteration_bounds = array<i64: 2, 2>, scalar_prefetch = 0 : i64, scratch_operands = 0 : i64, tpu.core_type = #tpu.core_type<tc>, window_params = [{transform_indices = @transform_0, window_bounds = array<i64: 1, 18, 18, 4>}, {pipeline_mode = #tpu.pipeline_mode<synchronous>, transform_indices = @transform_1, window_bounds = array<i64: 36, 128>}, {pipeline_mode = #tpu.pipeline_mode<synchronous>, transform_indices = @transform_2, window_bounds = array<i64: 1, 128>}, {pipeline_mode = #tpu.pipeline_mode<synchronous>, transform_indices = @transform_3, window_bounds = array<i64: 1, 128>}, {transform_indices = @transform_4, window_bounds = array<i64: 1, 8, 16, 128>}]} {
    %c8_i32 = arith.constant 8 : i32
    %0 = arith.muli %arg1, %c8_i32 : i32
    %c0_i32 = arith.constant 0 : i32
    %1 = arith.addi %0, %c0_i32 : i32
    %c0 = arith.constant 0 : index
    %2 = arith.index_cast %1 : i32 to index
    %c0_0 = arith.constant 0 : index
    %c0_1 = arith.constant 0 : index
    %3 = vector.load %arg2[%c0, %2, %c0_0, %c0_1] : memref<1x18x18x4xbf16, #tpu.memory_space<vmem>>, vector<1x8x16x4xbf16>
    %4 = vector.shape_cast %3 : vector<1x8x16x4xbf16> to vector<8x16x4xbf16>
    %c0_i32_2 = arith.constant 0 : i32
    %5 = arith.addi %0, %c0_i32_2 : i32
    %c0_3 = arith.constant 0 : index
    %6 = arith.index_cast %5 : i32 to index
    %c1 = arith.constant 1 : index
    %c0_4 = arith.constant 0 : index
    %7 = vector.load %arg2[%c0_3, %6, %c1, %c0_4] : memref<1x18x18x4xbf16, #tpu.memory_space<vmem>>, vector<1x8x16x4xbf16>
    %8 = vector.shape_cast %7 : vector<1x8x16x4xbf16> to vector<8x16x4xbf16>
    %c0_i32_5 = arith.constant 0 : i32
    %9 = arith.addi %0, %c0_i32_5 : i32
    %c0_6 = arith.constant 0 : index
    %10 = arith.index_cast %9 : i32 to index
    %c2 = arith.constant 2 : index
    %c0_7 = arith.constant 0 : index
    %11 = vector.load %arg2[%c0_6, %10, %c2, %c0_7] : memref<1x18x18x4xbf16, #tpu.memory_space<vmem>>, vector<1x8x16x4xbf16>
    %12 = vector.shape_cast %11 : vector<1x8x16x4xbf16> to vector<8x16x4xbf16>
    %c1_i32 = arith.constant 1 : i32
    %13 = arith.addi %0, %c1_i32 : i32
    %c0_8 = arith.constant 0 : index
    %14 = arith.index_cast %13 : i32 to index
    %c0_9 = arith.constant 0 : index
    %c0_10 = arith.constant 0 : index
    %15 = vector.load %arg2[%c0_8, %14, %c0_9, %c0_10] : memref<1x18x18x4xbf16, #tpu.memory_space<vmem>>, vector<1x8x16x4xbf16>
    %16 = vector.shape_cast %15 : vector<1x8x16x4xbf16> to vector<8x16x4xbf16>
    %c1_i32_11 = arith.constant 1 : i32
    %17 = arith.addi %0, %c1_i32_11 : i32
    %c0_12 = arith.constant 0 : index
    %18 = arith.index_cast %17 : i32 to index
    %c1_13 = arith.constant 1 : index
    %c0_14 = arith.constant 0 : index
    %19 = vector.load %arg2[%c0_12, %18, %c1_13, %c0_14] : memref<1x18x18x4xbf16, #tpu.memory_space<vmem>>, vector<1x8x16x4xbf16>
    %20 = vector.shape_cast %19 : vector<1x8x16x4xbf16> to vector<8x16x4xbf16>
    %c1_i32_15 = arith.constant 1 : i32
    %21 = arith.addi %0, %c1_i32_15 : i32
    %c0_16 = arith.constant 0 : index
    %22 = arith.index_cast %21 : i32 to index
    %c2_17 = arith.constant 2 : index
    %c0_18 = arith.constant 0 : index
    %23 = vector.load %arg2[%c0_16, %22, %c2_17, %c0_18] : memref<1x18x18x4xbf16, #tpu.memory_space<vmem>>, vector<1x8x16x4xbf16>
    %24 = vector.shape_cast %23 : vector<1x8x16x4xbf16> to vector<8x16x4xbf16>
    %c2_i32 = arith.constant 2 : i32
    %25 = arith.addi %0, %c2_i32 : i32
    %c0_19 = arith.constant 0 : index
    %26 = arith.index_cast %25 : i32 to index
    %c0_20 = arith.constant 0 : index
    %c0_21 = arith.constant 0 : index
    %27 = vector.load %arg2[%c0_19, %26, %c0_20, %c0_21] : memref<1x18x18x4xbf16, #tpu.memory_space<vmem>>, vector<1x8x16x4xbf16>
    %28 = vector.shape_cast %27 : vector<1x8x16x4xbf16> to vector<8x16x4xbf16>
    %c2_i32_22 = arith.constant 2 : i32
    %29 = arith.addi %0, %c2_i32_22 : i32
    %c0_23 = arith.constant 0 : index
    %30 = arith.index_cast %29 : i32 to index
    %c1_24 = arith.constant 1 : index
    %c0_25 = arith.constant 0 : index
    %31 = vector.load %arg2[%c0_23, %30, %c1_24, %c0_25] : memref<1x18x18x4xbf16, #tpu.memory_space<vmem>>, vector<1x8x16x4xbf16>
    %32 = vector.shape_cast %31 : vector<1x8x16x4xbf16> to vector<8x16x4xbf16>
    %c2_i32_26 = arith.constant 2 : i32
    %33 = arith.addi %0, %c2_i32_26 : i32
    %c0_27 = arith.constant 0 : index
    %34 = arith.index_cast %33 : i32 to index
    %c2_28 = arith.constant 2 : index
    %c0_29 = arith.constant 0 : index
    %35 = vector.load %arg2[%c0_27, %34, %c2_28, %c0_29] : memref<1x18x18x4xbf16, #tpu.memory_space<vmem>>, vector<1x8x16x4xbf16>
    %36 = vector.shape_cast %35 : vector<1x8x16x4xbf16> to vector<8x16x4xbf16>
    %37 = tpu.concatenate %4, %8, %12, %16, %20, %24, %28, %32, %36 in 2 : vector<8x16x4xbf16>, vector<8x16x4xbf16>, vector<8x16x4xbf16>, vector<8x16x4xbf16>, vector<8x16x4xbf16>, vector<8x16x4xbf16>, vector<8x16x4xbf16>, vector<8x16x4xbf16>, vector<8x16x4xbf16> -> vector<8x16x36xbf16>
    %38 = vector.shape_cast %37 : vector<8x16x36xbf16> to vector<128x36xbf16>
    %c0_30 = arith.constant 0 : index
    %c0_31 = arith.constant 0 : index
    %39 = vector.load %arg3[%c0_30, %c0_31] : memref<36x128xbf16, #tpu.memory_space<vmem>>, vector<36x128xbf16>
    %cst = arith.constant dense<0.000000e+00> : vector<128x128xf32>
    %40 = tpu.matmul %38, %39, %cst {dimension_numbers = #tpu.dot_dimension_numbers<[1], [0], [0], [1], [0, 0, 1, 1], [], []>} : vector<128x36xbf16>, vector<36x128xbf16>, vector<128x128xf32> -> vector<128x128xf32>
    %c0_32 = arith.constant 0 : index
    %c0_33 = arith.constant 0 : index
    %41 = vector.load %arg4[%c0_32, %c0_33] : memref<1x128xf32, #tpu.memory_space<vmem>>, vector<1x128xf32>
    %42 = vector.broadcast %41 : vector<1x128xf32> to vector<128x128xf32>
    %43 = arith.mulf %40, %42 : vector<128x128xf32>
    %c0_34 = arith.constant 0 : index
    %c0_35 = arith.constant 0 : index
    %44 = vector.load %arg5[%c0_34, %c0_35] : memref<1x128xf32, #tpu.memory_space<vmem>>, vector<1x128xf32>
    %45 = vector.broadcast %44 : vector<1x128xf32> to vector<128x128xf32>
    %46 = arith.addf %43, %45 : vector<128x128xf32>
    %cst_36 = arith.constant 0.000000e+00 : f32
    %47 = vector.broadcast %cst_36 : f32 to vector<128x128xf32>
    %48 = arith.maximumf %46, %47 : vector<128x128xf32>
    %49 = vector.shape_cast %48 : vector<128x128xf32> to vector<8x16x128xf32>
    %50 = arith.truncf %49 : vector<8x16x128xf32> to vector<8x16x128xbf16>
    %c0_37 = arith.constant 0 : index
    %c0_38 = arith.constant 0 : index
    %c0_39 = arith.constant 0 : index
    %c0_40 = arith.constant 0 : index
    %51 = vector.load %arg6[%c0_37, %c0_38, %c0_39, %c0_40] : memref<1x8x16x128xbf16, #tpu.memory_space<vmem>>, vector<1x8x16x128xbf16>
    %52 = vector.shape_cast %51 : vector<1x8x16x128xbf16> to vector<8x16x128xbf16>
    %53 = vector.shape_cast %50 : vector<8x16x128xbf16> to vector<1x8x16x128xbf16>
    tpu.vector_store %arg6[%c0_37, %c0_38, %c0_39, %c0_40], %53 {strides = array<i32>} : memref<1x8x16x128xbf16, #tpu.memory_space<vmem>>, vector<1x8x16x128xbf16>,
    return
  }
  func.func @transform_0(%arg0: i32, %arg1: i32) -> (i32, i32, i32, i32) {
    %c0_i32 = arith.constant 0 : i32
    %c0_i32_0 = arith.constant 0 : i32
    %c0_i32_1 = arith.constant 0 : i32
    %c0_i32_2 = arith.constant 0 : i32
    return %arg0, %c0_i32, %c0_i32_0, %c0_i32_1 : i32, i32, i32, i32
  }
  func.func @transform_1(%arg0: i32, %arg1: i32) -> (i32, i32) {
    %c0_i32 = arith.constant 0 : i32
    %c0_i32_0 = arith.constant 0 : i32
    %c0_i32_1 = arith.constant 0 : i32
    return %c0_i32, %c0_i32_0 : i32, i32
  }
  func.func @transform_2(%arg0: i32, %arg1: i32) -> (i32, i32) {
    %c0_i32 = arith.constant 0 : i32
    %c0_i32_0 = arith.constant 0 : i32
    %c0_i32_1 = arith.constant 0 : i32
    return %c0_i32, %c0_i32_0 : i32, i32
  }
  func.func @transform_3(%arg0: i32, %arg1: i32) -> (i32, i32) {
    %c0_i32 = arith.constant 0 : i32
    %c0_i32_0 = arith.constant 0 : i32
    %c0_i32_1 = arith.constant 0 : i32
    return %c0_i32, %c0_i32_0 : i32, i32
  }
  func.func @transform_4(%arg0: i32, %arg1: i32) -> (i32, i32, i32, i32) {
    %c0_i32 = arith.constant 0 : i32
    %c0_i32_0 = arith.constant 0 : i32
    %c0_i32_1 = arith.constant 0 : i32
    return %arg0, %arg1, %c0_i32, %c0_i32_0 : i32, i32, i32, i32
  }
}

</mosaic_0001>

<llo_original>
// kernel: conv_batch_norm.2
$region0: #{conv_batch_norm.2}
  #allocation0 [shape = 'u32[]', space=smem, size = 0x4, offset = 0x4, fixed_abs, tag = 'smem constant byte address 0x4 - core index']
  #allocation1 [shape = 'u32[144,128]{1,0:T(1,128)}', space=vmem, size = 0x12000, scoped, tag = 'internal scratch']
  %s0 = inlined_call_operand.vmem [shape: bf16[2,18,18,4], index: 0, kind: input, shape index: {}]
  %s1 = inlined_call_operand.vmem [shape: bf16[36,128], index: 1, kind: input, shape index: {}]
  %s2 = inlined_call_operand.vmem [shape: f32[2,8,128], index: 2, kind: output, shape index: {}]
  %s3 = sld [smem:[#allocation0]]
  $region45: #{conv_batch_norm.2} parent=0
    _
  %s5 = ssub.s32 1, %s3
  %s6 = scalar_select 0, %s5, %s3
  loop: start=0, step=1, limit=6
  $region2: #{conv_batch_norm.2} parent=0 // loop_pre_header
    _
  $region3: #{conv_batch_norm.2} parent=0 // loop_header
    %s8 = sphi 0, %s12
    %p9 = scmp.ge.s32.totalorder %s8, 6
    %s15 = sphi 0, %s27
    %s16 = sphi 0, %s23
    %s17 = sphi 0, %s15
    %s18 = sphi 0, %s16
    %s19 = sphi 0, %s17
    %s20 = sphi 0, %s18
    %s30 = sphi 0, %s32
    %s33 = sphi 0, %s30
    %s34 = sphi 0, %s33
    %s50 = sphi 0, %s34
    %s54 = sphi 0, %s54
    %s56 = sphi 0, %s54
    %s57 = sphi 0, %s56
    %s71 = sphi 0, %s57
    %s77 = sphi 0, %s79
    %s80 = sphi 0, %s77
    %s81 = sphi 0, %s80
    %s97 = sphi 0, %s81
  $region4: #{conv_batch_norm.2} parent=0 // loop_header_branch
    %11 = sbr.rel (%p9) target = $region8
  $region5: #{conv_batch_norm.2} parent=0 // loop_body
    %s13 = ssub.s32 %s8, 1
    %s14 = ssub.s32 %s8, 2
    %s21 = sadd.s32 1, %s16
    %p22 = scmp.ge.s32.totalorder %s21, 2
    %s23 = scalar_select %p22, 0, %s21
    %s24 = sadd.s32 1, %s15
    %s25 = scalar_select %p22, %s24, %s15
    %p26 = scmp.ge.s32.totalorder %s25, 2
    %s27 = scalar_select %p26, 0, %s25
    %s28 = ssub.s32 %s15, %s27
    %p29 = scmp.eq.s32.totalorder %s28, 0
    %s31 = sadd.s32 %s30, 1
    %s32 = scalar_select %p29, %s30, %s31
    %p35 = pneg %p29
    %p36 = scmp.eq.s32.totalorder %s8, 3
    %p37 = por %p35, %p36
    %p38 = scmp.ne.s32.totalorder %s30, %s33
    %p39 = scmp.eq.s32.totalorder %s8, 0
    %p40 = por %p38, %p39
    %p41 = scmp.ne.s32.totalorder %s30, %s33
    %p42 = scmp.eq.s32.totalorder %s13, 3
    %p43 = por %p41, %p42
    %p44 = scmp.ne.s32.totalorder %s33, %s34
    %p45 = scmp.eq.s32.totalorder %s13, 0
    %p46 = por %p44, %p45
    %p47 = scmp.ne.s32.totalorder %s33, %s34
    %p48 = scmp.eq.s32.totalorder %s14, 3
    %p49 = por %p47, %p48
    %p51 = scmp.ne.s32.totalorder %s34, %s50
    %p52 = scmp.eq.s32.totalorder %s14, 0
    %p53 = por %p51, %p52
    %s55 = sadd.s32 %s54, 1
    %p58 = scmp.eq.s32.totalorder %s8, 3
    %p59 = scmp.ne.s32.totalorder %s54, %s56
    %p60 = scmp.eq.s32.totalorder %s8, 0
    %p61 = por %p59, %p60
    %p62 = scmp.ne.s32.totalorder %s54, %s56
    %p63 = scmp.eq.s32.totalorder %s13, 3
    %p64 = por %p62, %p63
    %p65 = scmp.ne.s32.totalorder %s56, %s57
    %p66 = scmp.eq.s32.totalorder %s13, 0
    %p67 = por %p65, %p66
    %p68 = scmp.ne.s32.totalorder %s56, %s57
    %p69 = scmp.eq.s32.totalorder %s14, 3
    %p70 = por %p68, %p69
    %p72 = scmp.ne.s32.totalorder %s57, %s71
    %p73 = scmp.eq.s32.totalorder %s14, 0
    %p74 = por %p72, %p73
    %s75 = ssub.s32 %s15, %s27
    %p76 = scmp.eq.s32.totalorder %s75, 0
    %s78 = sadd.s32 %s77, 1
    %s79 = scalar_select %p76, %s77, %s78
    %p82 = pneg %p76
    %p83 = scmp.eq.s32.totalorder %s8, 3
    %p84 = por %p82, %p83
    %p85 = scmp.ne.s32.totalorder %s77, %s80
    %p86 = scmp.eq.s32.totalorder %s8, 0
    %p87 = por %p85, %p86
    %p88 = scmp.ne.s32.totalorder %s77, %s80
    %p89 = scmp.eq.s32.totalorder %s13, 3
    %p90 = por %p88, %p89
    %p91 = scmp.ne.s32.totalorder %s80, %s81
    %p92 = scmp.eq.s32.totalorder %s13, 0
    %p93 = por %p91, %p92
    %p94 = scmp.ne.s32.totalorder %s80, %s81
    %p95 = scmp.eq.s32.totalorder %s14, 3
    %p96 = por %p94, %p95
    %p98 = scmp.ne.s32.totalorder %s81, %s97
    %p99 = scmp.eq.s32.totalorder %s14, 0
    %p100 = por %p98, %p99
    %p101 = scmp.le.s32.totalorder 1, %s8
    %p102 = scmp.lt.s32.totalorder %s8, 5
    %p103 = pnand %p101, %p102
    %p104 = pneg %p103
    // Predicated region
    $region9: #{conv_batch_norm.2} parent=5 // pred_check
      _
    $region10: #{conv_batch_norm.2} parent=5 // pred_check_branch
      %106 = sbr.rel (%p103) target = $region12
    $region11: #{conv_batch_norm.2} parent=5 // pred_region
      %s107 = ssub.s32 %s8, 1
      // Predicated region
      $region13: #{conv_batch_norm.2} parent=11 // pred_check
        %p108 = pneg %p67
      $region14: #{conv_batch_norm.2} parent=11 // pred_check_branch
        %110 = sbr.rel (%p108) target = $region16
      $region15: #{conv_batch_norm.2} parent=11 // pred_region
        _
      $region16: #{conv_batch_norm.2} parent=11 // pred_fallthru
        _
    $region12: #{conv_batch_norm.2} parent=5 // pred_fallthru
      _
    %p111 = scmp.lt.s32.totalorder %s8, 4
    // Predicated region
    $region17: #{conv_batch_norm.2} parent=5 // pred_check
      %p112 = pneg %p111
    $region18: #{conv_batch_norm.2} parent=5 // pred_check_branch
      %114 = sbr.rel (%p112) target = $region20
    $region19: #{conv_batch_norm.2} parent=5 // pred_region
      // Predicated region
      $region21: #{conv_batch_norm.2} parent=19 // pred_check
        %p115 = pneg %p40
      $region22: #{conv_batch_norm.2} parent=19 // pred_check_branch
        %117 = sbr.rel (%p115) target = $region24
      $region23: #{conv_batch_norm.2} parent=19 // pred_region
        %p118 = scmp.lt.s32.totalorder %s15, 1
        %s119 = scalar_select %p118, %s15, 1
        %s120 = smul.addr %s119, 54
        %s121 = smul.addr %s120, 4
        %s122 = scalar_lea.vmem %s0, %s121
      $region24: #{conv_batch_norm.2} parent=19 // pred_fallthru
        _
    $region20: #{conv_batch_norm.2} parent=5 // pred_fallthru
      _
    %p123 = scmp.le.s32.totalorder 1, %s8
    %p124 = scmp.lt.s32.totalorder %s8, 5
    %p125 = pnand %p123, %p124
    %p126 = pneg %p125
    // Predicated region
    $region25: #{conv_batch_norm.2} parent=5 // pred_check
      _
    $region26: #{conv_batch_norm.2} parent=5 // pred_check_branch
      %128 = sbr.rel (%p125) target = $region28
    $region27: #{conv_batch_norm.2} parent=5 // pred_region
      %s129 = ssub.s32 %s8, 1
      %p130 = scmp.lt.s32.totalorder %s17, 1
      %s131 = scalar_select %p130, %s17, 1
      %s132 = smul.addr %s131, 54
      %s133 = smul.addr %s132, 4
      %s134 = scalar_lea.vmem %s0, %s133
      %p135 = pneg %p46
      %p136 = pneg %p43
      %p137 = pneg %p67
      %p138 = pneg %p64
      %p139 = pneg %p93
      %p140 = pneg %p90
      %p141 = scmp.lt.s32.totalorder %s17, 1
      %s142 = scalar_select %p141, %s17, 1
      %s143 = smul.addr %s142, 8
      %s144 = scalar_lea.vmem %s2, %s143
      %p145 = scmp.lt.s32.totalorder %s17, 1
      %s146 = scalar_select %p145, %s17, 1
      %s147 = smul.addr %s146, 54
      %s148 = smul.addr %s147, 4
      %s149 = scalar_lea.vmem %s0, %s148
      %p150 = scmp.lt.s32.totalorder %s17, 1
      %s151 = scalar_select %p150, %s17, 1
      %s152 = smul.addr %s151, 8
      %s153 = scalar_lea.vmem %s2, %s152
      %s155 = smul.u32 %s18, 8
      %s156 = smul.u32 %s155, 3
      %s157 = smul.addr %s156, 4
      %s158 = scalar_lea.vmem %s149, %s157
      %v159 = vld [vmem:[%s158] sm:$0xf]
      %v160 = vld [vmem:[%s158 + $0x4] sm:$0xf]
      %v161 = vld [vmem:[%s158 + $0xc] sm:$0xf]
      %v162 = vld [vmem:[%s158 + $0x10] sm:$0xf]
      %v163 = vld [vmem:[%s158 + $0x18] sm:$0xf]
      %v164 = vld [vmem:[%s158 + $0x1c] sm:$0xf]
      %v165 = vld [vmem:[%s158 + $0x24] sm:$0xf]
      %v166 = vld [vmem:[%s158 + $0x28] sm:$0xf]
      %v167 = vld [vmem:[%s158 + $0x30] sm:$0xf]
      %v168 = vld [vmem:[%s158 + $0x34] sm:$0xf]
      %v169 = vld [vmem:[%s158 + $0x3c] sm:$0xf]
      %v170 = vld [vmem:[%s158 + $0x40] sm:$0xf]
      %v171 = vld [vmem:[%s158 + $0x48] sm:$0xf]
      %v172 = vld [vmem:[%s158 + $0x4c] sm:$0xf]
      %v173 = vld [vmem:[%s158 + $0x54] sm:$0xf]
      %v174 = vld [vmem:[%s158 + $0x58] sm:$0xf]
      %v175 = vld [vmem:[%s158 + $0x8] sm:$0x1]
      %v176 = vld [vmem:[%s158 + $0x14] sm:$0x1]
      %v177 = vld [vmem:[%s158 + $0x20] sm:$0x1]
      %v178 = vld [vmem:[%s158 + $0x2c] sm:$0x1]
      %v179 = vld [vmem:[%s158 + $0x38] sm:$0x1]
      %v180 = vld [vmem:[%s158 + $0x44] sm:$0x1]
      %v181 = vld [vmem:[%s158 + $0x50] sm:$0x1]
      %v182 = vld [vmem:[%s158 + $0x5c] sm:$0x1]
      %v183 = vld [vmem:[%s158] sm:$0xe]
      %v184 = vld [vmem:[%s158 + $0xc] sm:$0xe]
      %v185 = vld [vmem:[%s158 + $0x18] sm:$0xe]
      %v186 = vld [vmem:[%s158 + $0x24] sm:$0xe]
      %v187 = vld [vmem:[%s158 + $0x30] sm:$0xe]
      %v188 = vld [vmem:[%s158 + $0x3c] sm:$0xe]
      %v189 = vld [vmem:[%s158 + $0x48] sm:$0xe]
      %v190 = vld [vmem:[%s158 + $0x54] sm:$0xe]
      %s191 = sadd.s32 %s155, 1
      %s192 = smul.u32 %s191, 3
      %s193 = smul.addr %s192, 4
      %s194 = scalar_lea.vmem %s149, %s193
      %v195 = vld [vmem:[%s194] sm:$0xf]
      %v196 = vld [vmem:[%s194 + $0x4] sm:$0xf]
      %v197 = vld [vmem:[%s194 + $0xc] sm:$0xf]
      %v198 = vld [vmem:[%s194 + $0x10] sm:$0xf]
      %v199 = vld [vmem:[%s194 + $0x18] sm:$0xf]
      %v200 = vld [vmem:[%s194 + $0x1c] sm:$0xf]
      %v201 = vld [vmem:[%s194 + $0x24] sm:$0xf]
      %v202 = vld [vmem:[%s194 + $0x28] sm:$0xf]
      %v203 = vld [vmem:[%s194 + $0x30] sm:$0xf]
      %v204 = vld [vmem:[%s194 + $0x34] sm:$0xf]
      %v205 = vld [vmem:[%s194 + $0x3c] sm:$0xf]
      %v206 = vld [vmem:[%s194 + $0x40] sm:$0xf]
      %v207 = vld [vmem:[%s194 + $0x48] sm:$0xf]
      %v208 = vld [vmem:[%s194 + $0x4c] sm:$0xf]
      %v209 = vld [vmem:[%s194 + $0x54] sm:$0xf]
      %v210 = vld [vmem:[%s194 + $0x58] sm:$0xf]
      %v211 = vld [vmem:[%s194 + $0x8] sm:$0x1]
      %v212 = vld [vmem:[%s194 + $0x14] sm:$0x1]
      %v213 = vld [vmem:[%s194 + $0x20] sm:$0x1]
      %v214 = vld [vmem:[%s194 + $0x2c] sm:$0x1]
      %v215 = vld [vmem:[%s194 + $0x38] sm:$0x1]
      %v216 = vld [vmem:[%s194 + $0x44] sm:$0x1]
      %v217 = vld [vmem:[%s194 + $0x50] sm:$0x1]
      %v218 = vld [vmem:[%s194 + $0x5c] sm:$0x1]
      %v219 = vld [vmem:[%s194] sm:$0xe]
      %v220 = vld [vmem:[%s194 + $0xc] sm:$0xe]
      %v221 = vld [vmem:[%s194 + $0x18] sm:$0xe]
      %v222 = vld [vmem:[%s194 + $0x24] sm:$0xe]
      %v223 = vld [vmem:[%s194 + $0x30] sm:$0xe]
      %v224 = vld [vmem:[%s194 + $0x3c] sm:$0xe]
      %v225 = vld [vmem:[%s194 + $0x48] sm:$0xe]
      %v226 = vld [vmem:[%s194 + $0x54] sm:$0xe]
      %s227 = sadd.s32 %s155, 2
      %s228 = smul.u32 %s227, 3
      %s229 = smul.addr %s228, 4
      %s230 = scalar_lea.vmem %s149, %s229
      %v231 = vld [vmem:[%s230] sm:$0xf]
      %v232 = vld [vmem:[%s230 + $0x4] sm:$0xf]
      %v233 = vld [vmem:[%s230 + $0xc] sm:$0xf]
      %v234 = vld [vmem:[%s230 + $0x10] sm:$0xf]
      %v235 = vld [vmem:[%s230 + $0x18] sm:$0xf]
      %v236 = vld [vmem:[%s230 + $0x1c] sm:$0xf]
      %v237 = vld [vmem:[%s230 + $0x24] sm:$0xf]
      %v238 = vld [vmem:[%s230 + $0x28] sm:$0xf]
      %v239 = vld [vmem:[%s230 + $0x30] sm:$0xf]
      %v240 = vld [vmem:[%s230 + $0x34] sm:$0xf]
      %v241 = vld [vmem:[%s230 + $0x3c] sm:$0xf]
      %v242 = vld [vmem:[%s230 + $0x40] sm:$0xf]
      %v243 = vld [vmem:[%s230 + $0x48] sm:$0xf]
      %v244 = vld [vmem:[%s230 + $0x4c] sm:$0xf]
      %v245 = vld [vmem:[%s230 + $0x54] sm:$0xf]
      %v246 = vld [vmem:[%s230 + $0x58] sm:$0xf]
      %v247 = vld [vmem:[%s230 + $0x8] sm:$0x1]
      %v248 = vld [vmem:[%s230 + $0x14] sm:$0x1]
      %v249 = vld [vmem:[%s230 + $0x20] sm:$0x1]
      %v250 = vld [vmem:[%s230 + $0x2c] sm:$0x1]
      %v251 = vld [vmem:[%s230 + $0x38] sm:$0x1]
      %v252 = vld [vmem:[%s230 + $0x44] sm:$0x1]
      %v253 = vld [vmem:[%s230 + $0x50] sm:$0x1]
      %v254 = vld [vmem:[%s230 + $0x5c] sm:$0x1]
      %v255 = vld [vmem:[%s230] sm:$0xe]
      %v256 = vld [vmem:[%s230 + $0xc] sm:$0xe]
      %v257 = vld [vmem:[%s230 + $0x18] sm:$0xe]
      %v258 = vld [vmem:[%s230 + $0x24] sm:$0xe]
      %v259 = vld [vmem:[%s230 + $0x30] sm:$0xe]
      %v260 = vld [vmem:[%s230 + $0x3c] sm:$0xe]
      %v261 = vld [vmem:[%s230 + $0x48] sm:$0xe]
      %v262 = vld [vmem:[%s230 + $0x54] sm:$0xe]
      %v279 = vunpack.c.l.b16 %v159
      %v280 = vunpack.c.l.b16 %v160
      %v281 = vunpack.c.l.b16 %v161
      %v282 = vunpack.c.l.b16 %v162
      %v283 = vunpack.c.l.b16 %v163
      %v284 = vunpack.c.l.b16 %v164
      %v285 = vunpack.c.l.b16 %v165
      %v286 = vunpack.c.l.b16 %v166
      %v287 = vunpack.c.l.b16 %v167
      %v288 = vunpack.c.l.b16 %v168
      %v289 = vunpack.c.l.b16 %v169
      %v290 = vunpack.c.l.b16 %v170
      %v291 = vunpack.c.l.b16 %v171
      %v292 = vunpack.c.l.b16 %v172
      %v293 = vunpack.c.l.b16 %v173
      %v294 = vunpack.c.l.b16 %v174
      %v295 = vpack.c.b16 %v280, %v279
      %v296 = vpack.c.b16 %v282, %v281
      %v297 = vpack.c.b16 %v284, %v283
      %v298 = vpack.c.b16 %v286, %v285
      %v299 = vpack.c.b16 %v288, %v287
      %v300 = vpack.c.b16 %v290, %v289
      %v301 = vpack.c.b16 %v292, %v291
      %v302 = vpack.c.b16 %v294, %v293
      %v311 = vunpack.c.l.b16 %v175
      %v312 = vunpack.c.l.b16 %v176
      %v313 = vunpack.c.l.b16 %v177
      %v314 = vunpack.c.l.b16 %v178
      %v315 = vunpack.c.l.b16 %v179
      %v316 = vunpack.c.l.b16 %v180
      %v317 = vunpack.c.l.b16 %v181
      %v318 = vunpack.c.l.b16 %v182
      %v319 = vpack.c.b16 %v311, %v311
      %v320 = vpack.c.b16 %v312, %v312
      %v321 = vpack.c.b16 %v313, %v313
      %v322 = vpack.c.b16 %v314, %v314
      %v323 = vpack.c.b16 %v315, %v315
      %v324 = vpack.c.b16 %v316, %v316
      %v325 = vpack.c.b16 %v317, %v317
      %v326 = vpack.c.b16 %v318, %v318
      %vm327 = vsmask.f32 7424
      %v329 = vshrl.u32 %v295, 16
      %v331 = vshll.u32 %v295, 16
      %v333 = vrot.slane %v331, 1
      %v334 = vor.u32 %v329, %v333
      %v336 = vshll.u32 %v319, 16
      %v338 = vrot.slane %v336, 1
      %v339 = vsel %vm327, %v334, %v338
      %v341 = vshrl.u32 %v296, 16
      %v343 = vshll.u32 %v296, 16
      %v345 = vrot.slane %v343, 1
      %v346 = vor.u32 %v341, %v345
      %v348 = vshll.u32 %v320, 16
      %v350 = vrot.slane %v348, 1
      %v351 = vsel %vm327, %v346, %v350
      %v353 = vshrl.u32 %v297, 16
      %v355 = vshll.u32 %v297, 16
      %v357 = vrot.slane %v355, 1
      %v358 = vor.u32 %v353, %v357
      %v360 = vshll.u32 %v321, 16
      %v362 = vrot.slane %v360, 1
      %v363 = vsel %vm327, %v358, %v362
      %v365 = vshrl.u32 %v298, 16
      %v367 = vshll.u32 %v298, 16
      %v369 = vrot.slane %v367, 1
      %v370 = vor.u32 %v365, %v369
      %v372 = vshll.u32 %v322, 16
      %v374 = vrot.slane %v372, 1
      %v375 = vsel %vm327, %v370, %v374
      %v377 = vshrl.u32 %v299, 16
      %v379 = vshll.u32 %v299, 16
      %v381 = vrot.slane %v379, 1
      %v382 = vor.u32 %v377, %v381
      %v384 = vshll.u32 %v323, 16
      %v386 = vrot.slane %v384, 1
      %v387 = vsel %vm327, %v382, %v386
      %v389 = vshrl.u32 %v300, 16
      %v391 = vshll.u32 %v300, 16
      %v393 = vrot.slane %v391, 1
      %v394 = vor.u32 %v389, %v393
      %v396 = vshll.u32 %v324, 16
      %v398 = vrot.slane %v396, 1
      %v399 = vsel %vm327, %v394, %v398
      %v401 = vshrl.u32 %v301, 16
      %v403 = vshll.u32 %v301, 16
      %v405 = vrot.slane %v403, 1
      %v406 = vor.u32 %v401, %v405
      %v408 = vshll.u32 %v325, 16
      %v410 = vrot.slane %v408, 1
      %v411 = vsel %vm327, %v406, %v410
      %v413 = vshrl.u32 %v302, 16
      %v415 = vshll.u32 %v302, 16
      %v417 = vrot.slane %v415, 1
      %v418 = vor.u32 %v413, %v417
      %v420 = vshll.u32 %v326, 16
      %v422 = vrot.slane %v420, 1
      %v423 = vsel %vm327, %v418, %v422
      %424 = vrot.lane.b32.xlu0 %v339, 4
      %v425 = vpop.permute.xlu0 %424
      %426 = vrot.lane.b32.xlu0 %v351, 4
      %v427 = vpop.permute.xlu0 %426
      %428 = vrot.lane.b32.xlu0 %v363, 4
      %v429 = vpop.permute.xlu0 %428
      %430 = vrot.lane.b32.xlu0 %v375, 4
      %v431 = vpop.permute.xlu0 %430
      %432 = vrot.lane.b32.xlu0 %v387, 4
      %v433 = vpop.permute.xlu0 %432
      %434 = vrot.lane.b32.xlu0 %v399, 4
      %v435 = vpop.permute.xlu0 %434
      %436 = vrot.lane.b32.xlu0 %v411, 4
      %v437 = vpop.permute.xlu0 %436
      %438 = vrot.lane.b32.xlu0 %v423, 4
      %v439 = vpop.permute.xlu0 %438
      %v448 = vunpack.c.l.b16 %v183
      %v449 = vunpack.c.l.b16 %v184
      %v450 = vunpack.c.l.b16 %v185
      %v451 = vunpack.c.l.b16 %v186
      %v452 = vunpack.c.l.b16 %v187
      %v453 = vunpack.c.l.b16 %v188
      %v454 = vunpack.c.l.b16 %v189
      %v455 = vunpack.c.l.b16 %v190
      %v456 = vpack.c.b16 %v280, %v448
      %v457 = vpack.c.b16 %v282, %v449
      %v458 = vpack.c.b16 %v284, %v450
      %v459 = vpack.c.b16 %v286, %v451
      %v460 = vpack.c.b16 %v288, %v452
      %v461 = vpack.c.b16 %v290, %v453
      %v462 = vpack.c.b16 %v292, %v454
      %v463 = vpack.c.b16 %v294, %v455
      %vm464 = vcmask 1046528
      %v465 = vrot.slane %v456, 1
      %v466 = vrot.slane %v319, 1
      %v467 = vsel %vm464, %v465, %v466
      %v468 = vrot.slane %v457, 1
      %v469 = vrot.slane %v320, 1
      %v470 = vsel %vm464, %v468, %v469
      %v471 = vrot.slane %v458, 1
      %v472 = vrot.slane %v321, 1
      %v473 = vsel %vm464, %v471, %v472
      %v474 = vrot.slane %v459, 1
      %v475 = vrot.slane %v322, 1
      %v476 = vsel %vm464, %v474, %v475
      %v477 = vrot.slane %v460, 1
      %v478 = vrot.slane %v323, 1
      %v479 = vsel %vm464, %v477, %v478
      %v480 = vrot.slane %v461, 1
      %v481 = vrot.slane %v324, 1
      %v482 = vsel %vm464, %v480, %v481
      %v483 = vrot.slane %v462, 1
      %v484 = vrot.slane %v325, 1
      %v485 = vsel %vm464, %v483, %v484
      %v486 = vrot.slane %v463, 1
      %v487 = vrot.slane %v326, 1
      %v488 = vsel %vm464, %v486, %v487
      %489 = vrot.lane.b32.xlu0 %v467, 8
      %v490 = vpop.permute.xlu0 %489
      %491 = vrot.lane.b32.xlu0 %v470, 8
      %v492 = vpop.permute.xlu0 %491
      %493 = vrot.lane.b32.xlu0 %v473, 8
      %v494 = vpop.permute.xlu0 %493
      %495 = vrot.lane.b32.xlu0 %v476, 8
      %v496 = vpop.permute.xlu0 %495
      %497 = vrot.lane.b32.xlu0 %v479, 8
      %v498 = vpop.permute.xlu0 %497
      %499 = vrot.lane.b32.xlu0 %v482, 8
      %v500 = vpop.permute.xlu0 %499
      %501 = vrot.lane.b32.xlu0 %v485, 8
      %v502 = vpop.permute.xlu0 %501
      %503 = vrot.lane.b32.xlu0 %v488, 8
      %v504 = vpop.permute.xlu0 %503
      %v521 = vunpack.c.l.b16 %v195
      %v522 = vunpack.c.l.b16 %v196
      %v523 = vunpack.c.l.b16 %v197
      %v524 = vunpack.c.l.b16 %v198
      %v525 = vunpack.c.l.b16 %v199
      %v526 = vunpack.c.l.b16 %v200
      %v527 = vunpack.c.l.b16 %v201
      %v528 = vunpack.c.l.b16 %v202
      %v529 = vunpack.c.l.b16 %v203
      %v530 = vunpack.c.l.b16 %v204
      %v531 = vunpack.c.l.b16 %v205
      %v532 = vunpack.c.l.b16 %v206
      %v533 = vunpack.c.l.b16 %v207
      %v534 = vunpack.c.l.b16 %v208
      %v535 = vunpack.c.l.b16 %v209
      %v536 = vunpack.c.l.b16 %v210
      %v537 = vpack.c.b16 %v522, %v521
      %v538 = vpack.c.b16 %v524, %v523
      %v539 = vpack.c.b16 %v526, %v525
      %v540 = vpack.c.b16 %v528, %v527
      %v541 = vpack.c.b16 %v530, %v529
      %v542 = vpack.c.b16 %v532, %v531
      %v543 = vpack.c.b16 %v534, %v533
      %v544 = vpack.c.b16 %v536, %v535
      %545 = vrot.lane.b32.xlu0 %v537, 12
      %v546 = vpop.permute.xlu0 %545
      %547 = vrot.lane.b32.xlu0 %v538, 12
      %v548 = vpop.permute.xlu0 %547
      %549 = vrot.lane.b32.xlu0 %v539, 12
      %v550 = vpop.permute.xlu0 %549
      %551 = vrot.lane.b32.xlu0 %v540, 12
      %v552 = vpop.permute.xlu0 %551
      %553 = vrot.lane.b32.xlu0 %v541, 12
      %v554 = vpop.permute.xlu0 %553
      %555 = vrot.lane.b32.xlu0 %v542, 12
      %v556 = vpop.permute.xlu0 %555
      %557 = vrot.lane.b32.xlu0 %v543, 12
      %v558 = vpop.permute.xlu0 %557
      %559 = vrot.lane.b32.xlu0 %v544, 12
      %v560 = vpop.permute.xlu0 %559
      %v569 = vunpack.c.l.b16 %v211
      %v570 = vunpack.c.l.b16 %v212
      %v571 = vunpack.c.l.b16 %v213
      %v572 = vunpack.c.l.b16 %v214
      %v573 = vunpack.c.l.b16 %v215
      %v574 = vunpack.c.l.b16 %v216
      %v575 = vunpack.c.l.b16 %v217
      %v576 = vunpack.c.l.b16 %v218
      %v577 = vpack.c.b16 %v569, %v569
      %v578 = vpack.c.b16 %v570, %v570
      %v579 = vpack.c.b16 %v571, %v571
      %v580 = vpack.c.b16 %v572, %v572
      %v581 = vpack.c.b16 %v573, %v573
      %v582 = vpack.c.b16 %v574, %v574
      %v583 = vpack.c.b16 %v575, %v575
      %v584 = vpack.c.b16 %v576, %v576
      %v586 = vshrl.u32 %v537, 16
      %v588 = vshll.u32 %v537, 16
      %v590 = vrot.slane %v588, 1
      %v591 = vor.u32 %v586, %v590
      %v593 = vshll.u32 %v577, 16
      %v595 = vrot.slane %v593, 1
      %v596 = vsel %vm327, %v591, %v595
      %v598 = vshrl.u32 %v538, 16
      %v600 = vshll.u32 %v538, 16
      %v602 = vrot.slane %v600, 1
      %v603 = vor.u32 %v598, %v602
      %v605 = vshll.u32 %v578, 16
      %v607 = vrot.slane %v605, 1
      %v608 = vsel %vm327, %v603, %v607
      %v610 = vshrl.u32 %v539, 16
      %v612 = vshll.u32 %v539, 16
      %v614 = vrot.slane %v612, 1
      %v615 = vor.u32 %v610, %v614
      %v617 = vshll.u32 %v579, 16
      %v619 = vrot.slane %v617, 1
      %v620 = vsel %vm327, %v615, %v619
      %v622 = vshrl.u32 %v540, 16
      %v624 = vshll.u32 %v540, 16
      %v626 = vrot.slane %v624, 1
      %v627 = vor.u32 %v622, %v626
      %v629 = vshll.u32 %v580, 16
      %v631 = vrot.slane %v629, 1
      %v632 = vsel %vm327, %v627, %v631
      %v634 = vshrl.u32 %v541, 16
      %v636 = vshll.u32 %v541, 16
      %v638 = vrot.slane %v636, 1
      %v639 = vor.u32 %v634, %v638
      %v641 = vshll.u32 %v581, 16
      %v643 = vrot.slane %v641, 1
      %v644 = vsel %vm327, %v639, %v643
      %v646 = vshrl.u32 %v542, 16
      %v648 = vshll.u32 %v542, 16
      %v650 = vrot.slane %v648, 1
      %v651 = vor.u32 %v646, %v650
      %v653 = vshll.u32 %v582, 16
      %v655 = vrot.slane %v653, 1
      %v656 = vsel %vm327, %v651, %v655
      %v658 = vshrl.u32 %v543, 16
      %v660 = vshll.u32 %v543, 16
      %v662 = vrot.slane %v660, 1
      %v663 = vor.u32 %v658, %v662
      %v665 = vshll.u32 %v583, 16
      %v667 = vrot.slane %v665, 1
      %v668 = vsel %vm327, %v663, %v667
      %v670 = vshrl.u32 %v544, 16
      %v672 = vshll.u32 %v544, 16
      %v674 = vrot.slane %v672, 1
      %v675 = vor.u32 %v670, %v674
      %v677 = vshll.u32 %v584, 16
      %v679 = vrot.slane %v677, 1
      %v680 = vsel %vm327, %v675, %v679
      %681 = vrot.lane.b32.xlu0 %v596, 16
      %v682 = vpop.permute.xlu0 %681
      %683 = vrot.lane.b32.xlu0 %v608, 16
      %v684 = vpop.permute.xlu0 %683
      %685 = vrot.lane.b32.xlu0 %v620, 16
      %v686 = vpop.permute.xlu0 %685
      %687 = vrot.lane.b32.xlu0 %v632, 16
      %v688 = vpop.permute.xlu0 %687
      %689 = vrot.lane.b32.xlu0 %v644, 16
      %v690 = vpop.permute.xlu0 %689
      %691 = vrot.lane.b32.xlu0 %v656, 16
      %v692 = vpop.permute.xlu0 %691
      %693 = vrot.lane.b32.xlu0 %v668, 16
      %v694 = vpop.permute.xlu0 %693
      %695 = vrot.lane.b32.xlu0 %v680, 16
      %v696 = vpop.permute.xlu0 %695
      %v705 = vunpack.c.l.b16 %v219
      %v706 = vunpack.c.l.b16 %v220
      %v707 = vunpack.c.l.b16 %v221
      %v708 = vunpack.c.l.b16 %v222
      %v709 = vunpack.c.l.b16 %v223
      %v710 = vunpack.c.l.b16 %v224
      %v711 = vunpack.c.l.b16 %v225
      %v712 = vunpack.c.l.b16 %v226
      %v713 = vpack.c.b16 %v522, %v705
      %v714 = vpack.c.b16 %v524, %v706
      %v715 = vpack.c.b16 %v526, %v707
      %v716 = vpack.c.b16 %v528, %v708
      %v717 = vpack.c.b16 %v530, %v709
      %v718 = vpack.c.b16 %v532, %v710
      %v719 = vpack.c.b16 %v534, %v711
      %v720 = vpack.c.b16 %v536, %v712
      %v721 = vrot.slane %v713, 1
      %v722 = vrot.slane %v577, 1
      %v723 = vsel %vm464, %v721, %v722
      %v724 = vrot.slane %v714, 1
      %v725 = vrot.slane %v578, 1
      %v726 = vsel %vm464, %v724, %v725
      %v727 = vrot.slane %v715, 1
      %v728 = vrot.slane %v579, 1
      %v729 = vsel %vm464, %v727, %v728
      %v730 = vrot.slane %v716, 1
      %v731 = vrot.slane %v580, 1
      %v732 = vsel %vm464, %v730, %v731
      %v733 = vrot.slane %v717, 1
      %v734 = vrot.slane %v581, 1
      %v735 = vsel %vm464, %v733, %v734
      %v736 = vrot.slane %v718, 1
      %v737 = vrot.slane %v582, 1
      %v738 = vsel %vm464, %v736, %v737
      %v739 = vrot.slane %v719, 1
      %v740 = vrot.slane %v583, 1
      %v741 = vsel %vm464, %v739, %v740
      %v742 = vrot.slane %v720, 1
      %v743 = vrot.slane %v584, 1
      %v744 = vsel %vm464, %v742, %v743
      %745 = vrot.lane.b32.xlu0 %v723, 20
      %v746 = vpop.permute.xlu0 %745
      %747 = vrot.lane.b32.xlu0 %v726, 20
      %v748 = vpop.permute.xlu0 %747
      %749 = vrot.lane.b32.xlu0 %v729, 20
      %v750 = vpop.permute.xlu0 %749
      %751 = vrot.lane.b32.xlu0 %v732, 20
      %v752 = vpop.permute.xlu0 %751
      %753 = vrot.lane.b32.xlu0 %v735, 20
      %v754 = vpop.permute.xlu0 %753
      %755 = vrot.lane.b32.xlu0 %v738, 20
      %v756 = vpop.permute.xlu0 %755
      %757 = vrot.lane.b32.xlu0 %v741, 20
      %v758 = vpop.permute.xlu0 %757
      %759 = vrot.lane.b32.xlu0 %v744, 20
      %v760 = vpop.permute.xlu0 %759
      %v777 = vunpack.c.l.b16 %v231
      %v778 = vunpack.c.l.b16 %v232
      %v779 = vunpack.c.l.b16 %v233
      %v780 = vunpack.c.l.b16 %v234
      %v781 = vunpack.c.l.b16 %v235
      %v782 = vunpack.c.l.b16 %v236
      %v783 = vunpack.c.l.b16 %v237
      %v784 = vunpack.c.l.b16 %v238
      %v785 = vunpack.c.l.b16 %v239
      %v786 = vunpack.c.l.b16 %v240
      %v787 = vunpack.c.l.b16 %v241
      %v788 = vunpack.c.l.b16 %v242
      %v789 = vunpack.c.l.b16 %v243
      %v790 = vunpack.c.l.b16 %v244
      %v791 = vunpack.c.l.b16 %v245
      %v792 = vunpack.c.l.b16 %v246
      %v793 = vpack.c.b16 %v778, %v777
      %v794 = vpack.c.b16 %v780, %v779
      %v795 = vpack.c.b16 %v782, %v781
      %v796 = vpack.c.b16 %v784, %v783
      %v797 = vpack.c.b16 %v786, %v785
      %v798 = vpack.c.b16 %v788, %v787
      %v799 = vpack.c.b16 %v790, %v789
      %v800 = vpack.c.b16 %v792, %v791
      %801 = vrot.lane.b32.xlu0 %v793, 24
      %v802 = vpop.permute.xlu0 %801
      %803 = vrot.lane.b32.xlu0 %v794, 24
      %v804 = vpop.permute.xlu0 %803
      %805 = vrot.lane.b32.xlu0 %v795, 24
      %v806 = vpop.permute.xlu0 %805
      %807 = vrot.lane.b32.xlu0 %v796, 24
      %v808 = vpop.permute.xlu0 %807
      %809 = vrot.lane.b32.xlu0 %v797, 24
      %v810 = vpop.permute.xlu0 %809
      %811 = vrot.lane.b32.xlu0 %v798, 24
      %v812 = vpop.permute.xlu0 %811
      %813 = vrot.lane.b32.xlu0 %v799, 24
      %v814 = vpop.permute.xlu0 %813
      %815 = vrot.lane.b32.xlu0 %v800, 24
      %v816 = vpop.permute.xlu0 %815
      %v825 = vunpack.c.l.b16 %v247
      %v826 = vunpack.c.l.b16 %v248
      %v827 = vunpack.c.l.b16 %v249
      %v828 = vunpack.c.l.b16 %v250
      %v829 = vunpack.c.l.b16 %v251
      %v830 = vunpack.c.l.b16 %v252
      %v831 = vunpack.c.l.b16 %v253
      %v832 = vunpack.c.l.b16 %v254
      %v833 = vpack.c.b16 %v825, %v825
      %v834 = vpack.c.b16 %v826, %v826
      %v835 = vpack.c.b16 %v827, %v827
      %v836 = vpack.c.b16 %v828, %v828
      %v837 = vpack.c.b16 %v829, %v829
      %v838 = vpack.c.b16 %v830, %v830
      %v839 = vpack.c.b16 %v831, %v831
      %v840 = vpack.c.b16 %v832, %v832
      %v842 = vshrl.u32 %v793, 16
      %v844 = vshll.u32 %v793, 16
      %v846 = vrot.slane %v844, 1
      %v847 = vor.u32 %v842, %v846
      %v849 = vshll.u32 %v833, 16
      %v851 = vrot.slane %v849, 1
      %v852 = vsel %vm327, %v847, %v851
      %v854 = vshrl.u32 %v794, 16
      %v856 = vshll.u32 %v794, 16
      %v858 = vrot.slane %v856, 1
      %v859 = vor.u32 %v854, %v858
      %v861 = vshll.u32 %v834, 16
      %v863 = vrot.slane %v861, 1
      %v864 = vsel %vm327, %v859, %v863
      %v866 = vshrl.u32 %v795, 16
      %v868 = vshll.u32 %v795, 16
      %v870 = vrot.slane %v868, 1
      %v871 = vor.u32 %v866, %v870
      %v873 = vshll.u32 %v835, 16
      %v875 = vrot.slane %v873, 1
      %v876 = vsel %vm327, %v871, %v875
      %v878 = vshrl.u32 %v796, 16
      %v880 = vshll.u32 %v796, 16
      %v882 = vrot.slane %v880, 1
      %v883 = vor.u32 %v878, %v882
      %v885 = vshll.u32 %v836, 16
      %v887 = vrot.slane %v885, 1
      %v888 = vsel %vm327, %v883, %v887
      %v890 = vshrl.u32 %v797, 16
      %v892 = vshll.u32 %v797, 16
      %v894 = vrot.slane %v892, 1
      %v895 = vor.u32 %v890, %v894
      %v897 = vshll.u32 %v837, 16
      %v899 = vrot.slane %v897, 1
      %v900 = vsel %vm327, %v895, %v899
      %v902 = vshrl.u32 %v798, 16
      %v904 = vshll.u32 %v798, 16
      %v906 = vrot.slane %v904, 1
      %v907 = vor.u32 %v902, %v906
      %v909 = vshll.u32 %v838, 16
      %v911 = vrot.slane %v909, 1
      %v912 = vsel %vm327, %v907, %v911
      %v914 = vshrl.u32 %v799, 16
      %v916 = vshll.u32 %v799, 16
      %v918 = vrot.slane %v916, 1
      %v919 = vor.u32 %v914, %v918
      %v921 = vshll.u32 %v839, 16
      %v923 = vrot.slane %v921, 1
      %v924 = vsel %vm327, %v919, %v923
      %v926 = vshrl.u32 %v800, 16
      %v928 = vshll.u32 %v800, 16
      %v930 = vrot.slane %v928, 1
      %v931 = vor.u32 %v926, %v930
      %v933 = vshll.u32 %v840, 16
      %v935 = vrot.slane %v933, 1
      %v936 = vsel %vm327, %v931, %v935
      %937 = vrot.lane.b32.xlu0 %v852, 28
      %v938 = vpop.permute.xlu0 %937
      %939 = vrot.lane.b32.xlu0 %v864, 28
      %v940 = vpop.permute.xlu0 %939
      %941 = vrot.lane.b32.xlu0 %v876, 28
      %v942 = vpop.permute.xlu0 %941
      %943 = vrot.lane.b32.xlu0 %v888, 28
      %v944 = vpop.permute.xlu0 %943
      %945 = vrot.lane.b32.xlu0 %v900, 28
      %v946 = vpop.permute.xlu0 %945
      %947 = vrot.lane.b32.xlu0 %v912, 28
      %v948 = vpop.permute.xlu0 %947
      %949 = vrot.lane.b32.xlu0 %v924, 28
      %v950 = vpop.permute.xlu0 %949
      %951 = vrot.lane.b32.xlu0 %v936, 28
      %v952 = vpop.permute.xlu0 %951
      %v961 = vunpack.c.l.b16 %v255
      %v962 = vunpack.c.l.b16 %v256
      %v963 = vunpack.c.l.b16 %v257
      %v964 = vunpack.c.l.b16 %v258
      %v965 = vunpack.c.l.b16 %v259
      %v966 = vunpack.c.l.b16 %v260
      %v967 = vunpack.c.l.b16 %v261
      %v968 = vunpack.c.l.b16 %v262
      %v969 = vpack.c.b16 %v778, %v961
      %v970 = vpack.c.b16 %v780, %v962
      %v971 = vpack.c.b16 %v782, %v963
      %v972 = vpack.c.b16 %v784, %v964
      %v973 = vpack.c.b16 %v786, %v965
      %v974 = vpack.c.b16 %v788, %v966
      %v975 = vpack.c.b16 %v790, %v967
      %v976 = vpack.c.b16 %v792, %v968
      %v977 = vrot.slane %v969, 1
      %v978 = vrot.slane %v833, 1
      %v979 = vsel %vm464, %v977, %v978
      %v980 = vrot.slane %v970, 1
      %v981 = vrot.slane %v834, 1
      %v982 = vsel %vm464, %v980, %v981
      %v983 = vrot.slane %v971, 1
      %v984 = vrot.slane %v835, 1
      %v985 = vsel %vm464, %v983, %v984
      %v986 = vrot.slane %v972, 1
      %v987 = vrot.slane %v836, 1
      %v988 = vsel %vm464, %v986, %v987
      %v989 = vrot.slane %v973, 1
      %v990 = vrot.slane %v837, 1
      %v991 = vsel %vm464, %v989, %v990
      %v992 = vrot.slane %v974, 1
      %v993 = vrot.slane %v838, 1
      %v994 = vsel %vm464, %v992, %v993
      %v995 = vrot.slane %v975, 1
      %v996 = vrot.slane %v839, 1
      %v997 = vsel %vm464, %v995, %v996
      %v998 = vrot.slane %v976, 1
      %v999 = vrot.slane %v840, 1
      %v1000 = vsel %vm464, %v998, %v999
      %1001 = vrot.lane.b32.xlu0 %v979, 32
      %v1002 = vpop.permute.xlu0 %1001
      %1003 = vrot.lane.b32.xlu0 %v982, 32
      %v1004 = vpop.permute.xlu0 %1003
      %1005 = vrot.lane.b32.xlu0 %v985, 32
      %v1006 = vpop.permute.xlu0 %1005
      %1007 = vrot.lane.b32.xlu0 %v988, 32
      %v1008 = vpop.permute.xlu0 %1007
      %1009 = vrot.lane.b32.xlu0 %v991, 32
      %v1010 = vpop.permute.xlu0 %1009
      %1011 = vrot.lane.b32.xlu0 %v994, 32
      %v1012 = vpop.permute.xlu0 %1011
      %1013 = vrot.lane.b32.xlu0 %v997, 32
      %v1014 = vpop.permute.xlu0 %1013
      %1015 = vrot.lane.b32.xlu0 %v1000, 32
      %v1016 = vpop.permute.xlu0 %1015
      %vm1017 = vcmask 31744
      %v1019 = vsel %vm1017, %v295, %v425
      %v1021 = vsel %vm1017, %v296, %v427
      %v1023 = vsel %vm1017, %v297, %v429
      %v1025 = vsel %vm1017, %v298, %v431
      %v1027 = vsel %vm1017, %v299, %v433
      %v1029 = vsel %vm1017, %v300, %v435
      %v1031 = vsel %vm1017, %v301, %v437
      %v1033 = vsel %vm1017, %v302, %v439
      %vm1034 = vcmask 64512
      %v1036 = vsel %vm1034, %v1019, %v490
      %v1038 = vsel %vm1034, %v1021, %v492
      %v1040 = vsel %vm1034, %v1023, %v494
      %v1042 = vsel %vm1034, %v1025, %v496
      %v1044 = vsel %vm1034, %v1027, %v498
      %v1046 = vsel %vm1034, %v1029, %v500
      %v1048 = vsel %vm1034, %v1031, %v502
      %v1050 = vsel %vm1034, %v1033, %v504
      %vm1051 = vcmask 97280
      %v1053 = vsel %vm1051, %v1036, %v546
      %v1055 = vsel %vm1051, %v1038, %v548
      %v1057 = vsel %vm1051, %v1040, %v550
      %v1059 = vsel %vm1051, %v1042, %v552
      %v1061 = vsel %vm1051, %v1044, %v554
      %v1063 = vsel %vm1051, %v1046, %v556
      %v1065 = vsel %vm1051, %v1048, %v558
      %v1067 = vsel %vm1051, %v1050, %v560
      %vm1068 = vcmask 130048
      %v1070 = vsel %vm1068, %v1053, %v682
      %v1072 = vsel %vm1068, %v1055, %v684
      %v1074 = vsel %vm1068, %v1057, %v686
      %v1076 = vsel %vm1068, %v1059, %v688
      %v1078 = vsel %vm1068, %v1061, %v690
      %v1080 = vsel %vm1068, %v1063, %v692
      %v1082 = vsel %vm1068, %v1065, %v694
      %v1084 = vsel %vm1068, %v1067, %v696
      %vm1085 = vcmask 162816
      %v1087 = vsel %vm1085, %v1070, %v746
      %v1089 = vsel %vm1085, %v1072, %v748
      %v1091 = vsel %vm1085, %v1074, %v750
      %v1093 = vsel %vm1085, %v1076, %v752
      %v1095 = vsel %vm1085, %v1078, %v754
      %v1097 = vsel %vm1085, %v1080, %v756
      %v1099 = vsel %vm1085, %v1082, %v758
      %v1101 = vsel %vm1085, %v1084, %v760
      %vm1102 = vcmask 195584
      %v1104 = vsel %vm1102, %v1087, %v802
      %v1106 = vsel %vm1102, %v1089, %v804
      %v1108 = vsel %vm1102, %v1091, %v806
      %v1110 = vsel %vm1102, %v1093, %v808
      %v1112 = vsel %vm1102, %v1095, %v810
      %v1114 = vsel %vm1102, %v1097, %v812
      %v1116 = vsel %vm1102, %v1099, %v814
      %v1118 = vsel %vm1102, %v1101, %v816
      %vm1119 = vcmask 228352
      %v1121 = vsel %vm1119, %v1104, %v938
      %v1123 = vsel %vm1119, %v1106, %v940
      %v1125 = vsel %vm1119, %v1108, %v942
      %v1127 = vsel %vm1119, %v1110, %v944
      %v1129 = vsel %vm1119, %v1112, %v946
      %v1131 = vsel %vm1119, %v1114, %v948
      %v1133 = vsel %vm1119, %v1116, %v950
      %v1135 = vsel %vm1119, %v1118, %v952
      %vm1136 = vcmask 261120
      %v1138 = vsel %vm1136, %v1121, %v1002
      %v1140 = vsel %vm1136, %v1123, %v1004
      %v1142 = vsel %vm1136, %v1125, %v1006
      %v1144 = vsel %vm1136, %v1127, %v1008
      %v1146 = vsel %vm1136, %v1129, %v1010
      %v1148 = vsel %vm1136, %v1131, %v1012
      %v1150 = vsel %vm1136, %v1133, %v1014
      %v1152 = vsel %vm1136, %v1135, %v1016
      %v1153 = vld [vmem:[%s1] sm:$0xf]
      %v1154 = vld [vmem:[%s1 + $0x4] sm:$0xf]
      %v1155 = vld [vmem:[%s1 + $0x8] sm:$0xf]
      %v1156 = vld [vmem:[%s1 + $0xc] sm:$0xf]
      %v1157 = vld [vmem:[%s1 + $0x10] sm:$0x3]
      %v1163 = vunpack.c.l.b16 %v1153
      %v1164 = vunpack.c.l.b16 %v1154
      %v1165 = vunpack.c.l.b16 %v1155
      %v1166 = vunpack.c.l.b16 %v1156
      %v1167 = vunpack.c.l.b16 %v1157
      %v1168 = vpack.c.b16 %v1164, %v1163
      %v1169 = vpack.c.b16 %v1166, %v1165
      %v1170 = vpack.c.b16 %v1167, %v1167
      %vm1173 = vcmask 293888
      %v1174 = vsel %vm1173, %v1138, 0
      %v1176 = vsel %vm1173, %v1140, 0
      %v1178 = vsel %vm1173, %v1142, 0
      %v1180 = vsel %vm1173, %v1144, 0
      %v1182 = vsel %vm1173, %v1146, 0
      %v1184 = vsel %vm1173, %v1148, 0
      %v1186 = vsel %vm1173, %v1150, 0
      %v1188 = vsel %vm1173, %v1152, 0
      %vm1190 = vcmask 1041408
      %v1192 = vsel %vm1190, %v1170, 0
      %1194 = vmatprep.subr.bf16.mxu0 0
      %1195 = vmatpush1.bf16.msra.mxu0 %v1168
      %1196 = vmatprep.subr.bf16.mxu0 0
      %1197 = vmatpush1.bf16.msra.mxu0 %v1169
      %1198 = vmatprep.subr.bf16.mxu0 0
      %1199 = vmatpush1.bf16.msra.mxu0 %v1192
      %1200 = vmatprep.subr.bf16.mxu0 0
      %1201 = vmatpush1.bf16.msra.mxu0 0
      %1202 = vmatprep.subr.bf16.mxu0 0
      %1203 = vmatpush1.bf16.msra.mxu0 0
      %1204 = vmatprep.subr.bf16.mxu0 0
      %1205 = vmatpush1.bf16.msra.mxu0 0
      %1206 = vmatprep.subr.bf16.mxu0 0
      %1207 = vmatpush1.bf16.msra.mxu0 0
      %1208 = vmatprep.subr.bf16.mxu0 0
      %1209 = vmatpush1.bf16.msra.mxu0 0
      %1210 = vmatprep.subr.bf16.mxu0 0
      %1211 = vmatpush1.bf16.msra.mxu0 0
      %1212 = vmatprep.subr.bf16.mxu0 0
      %1213 = vmatpush1.bf16.msra.mxu0 0
      %1214 = vmatprep.subr.bf16.mxu0 0
      %1215 = vmatpush1.bf16.msra.mxu0 0
      %1216 = vmatprep.subr.bf16.mxu0 0
      %1217 = vmatpush1.bf16.msra.mxu0 0
      %1218 = vmatprep.subr.bf16.mxu0 0
      %1219 = vmatpush1.bf16.msra.mxu0 0
      %1220 = vmatprep.subr.bf16.mxu0 0
      %1221 = vmatpush1.bf16.msra.mxu0 0
      %1222 = vmatprep.subr.bf16.mxu0 0
      %1223 = vmatpush1.bf16.msra.mxu0 0
      %1224 = vmatprep.subr.bf16.mxu0 0
      %1225 = vmatpush1.bf16.msra.mxu0 0
      %1226 = vmatprep.mubr.bf16.mxu0 0
      %1227 = vmatmul.mubr.bf16.gmra.mrb[0].mxu0 %v1174
      %v1228 = vpop.f32.mrb[0].mxu0
      %v1229 = vadd.f32 0.0, %v1228
      %v1230 = vpop.f32.mrb[0].mxu0
      %v1231 = vpop.f32.mrb[0].mxu0
      %v1232 = vadd.f32 0.0, %v1231
      %v1233 = vpop.f32.mrb[0].mxu0
      %1234 = vmatprep.mubr.bf16.mxu0 0
      %1235 = vmatmul.mubr.bf16.gmra.mrb[0].mxu0 %v1176
      %v1236 = vpop.f32.mrb[0].mxu0
      %v1237 = vadd.f32 0.0, %v1236
      %v1238 = vpop.f32.mrb[0].mxu0
      %v1239 = vpop.f32.mrb[0].mxu0
      %v1240 = vadd.f32 0.0, %v1239
      %v1241 = vpop.f32.mrb[0].mxu0
      %1242 = vmatprep.mubr.bf16.mxu0 0
      %1243 = vmatmul.mubr.bf16.gmra.mrb[0].mxu0 %v1178
      %v1244 = vpop.f32.mrb[0].mxu0
      %v1245 = vadd.f32 0.0, %v1244
      %v1246 = vpop.f32.mrb[0].mxu0
      %v1247 = vpop.f32.mrb[0].mxu0
      %v1248 = vadd.f32 0.0, %v1247
      %v1249 = vpop.f32.mrb[0].mxu0
      %1250 = vmatprep.mubr.bf16.mxu0 0
      %1251 = vmatmul.mubr.bf16.gmra.mrb[0].mxu0 %v1180
      %v1252 = vpop.f32.mrb[0].mxu0
      %v1253 = vadd.f32 0.0, %v1252
      %v1254 = vpop.f32.mrb[0].mxu0
      %v1255 = vpop.f32.mrb[0].mxu0
      %v1256 = vadd.f32 0.0, %v1255
      %v1257 = vpop.f32.mrb[0].mxu0
      %1258 = vmatprep.mubr.bf16.mxu0 0
      %1259 = vmatmul.mubr.bf16.gmra.mrb[0].mxu0 %v1182
      %v1260 = vpop.f32.mrb[0].mxu0
      %v1261 = vadd.f32 0.0, %v1260
      %v1262 = vpop.f32.mrb[0].mxu0
      %v1263 = vpop.f32.mrb[0].mxu0
      %v1264 = vadd.f32 0.0, %v1263
      %v1265 = vpop.f32.mrb[0].mxu0
      %1266 = vmatprep.mubr.bf16.mxu0 0
      %1267 = vmatmul.mubr.bf16.gmra.mrb[0].mxu0 %v1184
      %v1268 = vpop.f32.mrb[0].mxu0
      %v1269 = vadd.f32 0.0, %v1268
      %v1270 = vpop.f32.mrb[0].mxu0
      %v1271 = vpop.f32.mrb[0].mxu0
      %v1272 = vadd.f32 0.0, %v1271
      %v1273 = vpop.f32.mrb[0].mxu0
      %1274 = vmatprep.mubr.bf16.mxu0 0
      %1275 = vmatmul.mubr.bf16.gmra.mrb[0].mxu0 %v1186
      %v1276 = vpop.f32.mrb[0].mxu0
      %v1277 = vadd.f32 0.0, %v1276
      %v1278 = vpop.f32.mrb[0].mxu0
      %v1279 = vpop.f32.mrb[0].mxu0
      %v1280 = vadd.f32 0.0, %v1279
      %v1281 = vpop.f32.mrb[0].mxu0
      %1282 = vmatprep.mubr.bf16.mxu0 0
      %1283 = vmatmul.mubr.bf16.gmra.mrb[0].mxu0 %v1188
      %v1284 = vpop.f32.mrb[0].mxu0
      %v1285 = vadd.f32 0.0, %v1284
      %v1286 = vpop.f32.mrb[0].mxu0
      %v1287 = vpop.f32.mrb[0].mxu0
      %v1288 = vadd.f32 0.0, %v1287
      %v1289 = vpop.f32.mrb[0].mxu0
      %1290 = vdwg.mxu0
      %p1291 = scmp.eq.s32.totalorder %s18, 0
      // Predicated region
      $region29: #{conv_batch_norm.2} parent=27 // pred_check
        %p1292 = pneg %p1291
      $region30: #{conv_batch_norm.2} parent=27 // pred_check_branch
        %1294 = sbr.rel (%p1292) target = $region32
      $region31: #{conv_batch_norm.2} parent=27 // pred_region
        %1295 = vst [vmem:[%s153] sm:$0xff] 0.0
      $region32: #{conv_batch_norm.2} parent=27 // pred_fallthru
        _
      %v1296 = vadd.f32 %v1229, %v1232
      %v1297 = vadd.f32 %v1296, %v1237
      %v1298 = vadd.f32 %v1297, %v1240
      %v1299 = vadd.f32 %v1298, %v1245
      %v1300 = vadd.f32 %v1299, %v1248
      %v1301 = vadd.f32 %v1300, %v1253
      %v1302 = vadd.f32 %v1301, %v1256
      %v1303 = vadd.f32 %v1302, %v1261
      %v1304 = vadd.f32 %v1303, %v1264
      %v1305 = vadd.f32 %v1304, %v1269
      %v1306 = vadd.f32 %v1305, %v1272
      %v1307 = vadd.f32 %v1306, %v1277
      %v1308 = vadd.f32 %v1307, %v1280
      %v1309 = vadd.f32 %v1308, %v1285
      %v1310 = vadd.f32 %v1309, %v1288
      %v1311 = vrot.slane %v1310, 4
      %v1312 = vadd.f32 %v1310, %v1311
      %v1313 = vrot.slane %v1312, 2
      %v1314 = vadd.f32 %v1312, %v1313
      %v1315 = vrot.slane %v1314, 1
      %v1316 = vadd.f32 %v1314, %v1315
      %v1317 = vmul.f32 %v1229, %v1229
      %v1318 = vmul.f32 %v1232, %v1232
      %v1319 = vmul.f32 %v1237, %v1237
      %v1320 = vmul.f32 %v1240, %v1240
      %v1321 = vmul.f32 %v1245, %v1245
      %v1322 = vmul.f32 %v1248, %v1248
      %v1323 = vmul.f32 %v1253, %v1253
      %v1324 = vmul.f32 %v1256, %v1256
      %v1325 = vmul.f32 %v1261, %v1261
      %v1326 = vmul.f32 %v1264, %v1264
      %v1327 = vmul.f32 %v1269, %v1269
      %v1328 = vmul.f32 %v1272, %v1272
      %v1329 = vmul.f32 %v1277, %v1277
      %v1330 = vmul.f32 %v1280, %v1280
      %v1331 = vmul.f32 %v1285, %v1285
      %v1332 = vmul.f32 %v1288, %v1288
      %v1333 = vadd.f32 %v1317, %v1318
      %v1334 = vadd.f32 %v1333, %v1319
      %v1335 = vadd.f32 %v1334, %v1320
      %v1336 = vadd.f32 %v1335, %v1321
      %v1337 = vadd.f32 %v1336, %v1322
      %v1338 = vadd.f32 %v1337, %v1323
      %v1339 = vadd.f32 %v1338, %v1324
      %v1340 = vadd.f32 %v1339, %v1325
      %v1341 = vadd.f32 %v1340, %v1326
      %v1342 = vadd.f32 %v1341, %v1327
      %v1343 = vadd.f32 %v1342, %v1328
      %v1344 = vadd.f32 %v1343, %v1329
      %v1345 = vadd.f32 %v1344, %v1330
      %v1346 = vadd.f32 %v1345, %v1331
      %v1347 = vadd.f32 %v1346, %v1332
      %v1348 = vrot.slane %v1347, 4
      %v1349 = vadd.f32 %v1347, %v1348
      %v1350 = vrot.slane %v1349, 2
      %v1351 = vadd.f32 %v1349, %v1350
      %v1352 = vrot.slane %v1351, 1
      %v1353 = vadd.f32 %v1351, %v1352
      %vm1354 = vcmask 1040384
      %v1355 = vsel %vm1354, %v1316, %v1353
      %v1356 = vsel %vm1190, %v1355, 0.0
      %v1357 = vld [vmem:[%s153] sm:$0xff]
      %v1358 = vadd.f32 %v1357, %v1356
      %1359 = vst [vmem:[%s153] sm:$0xff] %v1358
      %p1360 = scmp.lt.s32.totalorder %s17, 1
      %s1361 = scalar_select %p1360, %s17, 1
      %s1362 = smul.addr %s1361, 8
      %s1363 = scalar_lea.vmem %s2, %s1362
      // Predicated region
      $region33: #{conv_batch_norm.2} parent=27 // pred_check
        %p1364 = pneg %p90
      $region34: #{conv_batch_norm.2} parent=27 // pred_check_branch
        %1366 = sbr.rel (%p1364) target = $region36
      $region35: #{conv_batch_norm.2} parent=27 // pred_region
        _
      $region36: #{conv_batch_norm.2} parent=27 // pred_fallthru
        _
    $region28: #{conv_batch_norm.2} parent=5 // pred_fallthru
      _
    %p1367 = scmp.le.s32.totalorder 2, %s8
    // Predicated region
    $region37: #{conv_batch_norm.2} parent=5 // pred_check
      %p1368 = pneg %p1367
    $region38: #{conv_batch_norm.2} parent=5 // pred_check_branch
      %1370 = sbr.rel (%p1368) target = $region40
    $region39: #{conv_batch_norm.2} parent=5 // pred_region
      %s1371 = ssub.s32 %s8, 2
      // Predicated region
      $region41: #{conv_batch_norm.2} parent=39 // pred_check
        %p1372 = pneg %p96
      $region42: #{conv_batch_norm.2} parent=39 // pred_check_branch
        %1374 = sbr.rel (%p1372) target = $region44
      $region43: #{conv_batch_norm.2} parent=39 // pred_region
        %p1375 = scmp.lt.s32.totalorder %s19, 1
        %s1376 = scalar_select %p1375, %s19, 1
        %s1377 = smul.addr %s1376, 8
        %s1378 = scalar_lea.vmem %s2, %s1377
      $region44: #{conv_batch_norm.2} parent=39 // pred_fallthru
        _
    $region40: #{conv_batch_norm.2} parent=5 // pred_fallthru
      _
  $region6: #{conv_batch_norm.2} parent=0 // loop_footer
    %s12 = sadd.s32 1, %s8
  $region7: #{conv_batch_norm.2} parent=0 // loop_footer_branch
    %7 = sbr.rel target = $region3
  $region8: #{conv_batch_norm.2} parent=0 // loop_exit
    _

// kernel: conv_batch_norm.3
$region0: #{conv_batch_norm.3}
  #allocation0 [shape = 'u32[]', space=smem, size = 0x4, offset = 0x4, fixed_abs, tag = 'smem constant byte address 0x4 - core index']
  #allocation1 [shape = 'u32[144,128]{1,0:T(1,128)}', space=vmem, size = 0x12000, scoped, tag = 'internal scratch']
  %s0 = inlined_call_operand.vmem [shape: bf16[2,18,18,4], index: 0, kind: input, shape index: {}]
  %s1 = inlined_call_operand.vmem [shape: bf16[36,128], index: 1, kind: input, shape index: {}]
  %s2 = inlined_call_operand.vmem [shape: f32[1,128], index: 2, kind: input, shape index: {}]
  %s3 = inlined_call_operand.vmem [shape: f32[1,128], index: 3, kind: input, shape index: {}]
  %s4 = inlined_call_operand.vmem [shape: bf16[2,16,16,128], index: 4, kind: output, shape index: {}]
  %s5 = sld [smem:[#allocation0]]
  $region49: #{conv_batch_norm.3} parent=0
    _
  %s7 = ssub.s32 1, %s5
  %s8 = scalar_select 0, %s7, %s5
  loop: start=0, step=1, limit=6
  $region2: #{conv_batch_norm.3} parent=0 // loop_pre_header
    _
  $region3: #{conv_batch_norm.3} parent=0 // loop_header
    %s10 = sphi 0, %s14
    %p11 = scmp.ge.s32.totalorder %s10, 6
    %s17 = sphi 0, %s29
    %s18 = sphi 0, %s25
    %s19 = sphi 0, %s17
    %s20 = sphi 0, %s18
    %s21 = sphi 0, %s19
    %s22 = sphi 0, %s20
    %s32 = sphi 0, %s34
    %s35 = sphi 0, %s32
    %s36 = sphi 0, %s35
    %s52 = sphi 0, %s36
    %s56 = sphi 0, %s56
    %s58 = sphi 0, %s56
    %s59 = sphi 0, %s58
    %s73 = sphi 0, %s59
    %s77 = sphi 0, %s77
    %s79 = sphi 0, %s77
    %s80 = sphi 0, %s79
    %s94 = sphi 0, %s80
    %s98 = sphi 0, %s98
    %s100 = sphi 0, %s98
    %s101 = sphi 0, %s100
    %s115 = sphi 0, %s101
    %s123 = sphi 0, %s125
    %s126 = sphi 0, %s123
    %s127 = sphi 0, %s126
    %s143 = sphi 0, %s127
  $region4: #{conv_batch_norm.3} parent=0 // loop_header_branch
    %13 = sbr.rel (%p11) target = $region8
  $region5: #{conv_batch_norm.3} parent=0 // loop_body
    %s15 = ssub.s32 %s10, 1
    %s16 = ssub.s32 %s10, 2
    %s23 = sadd.s32 1, %s18
    %p24 = scmp.ge.s32.totalorder %s23, 2
    %s25 = scalar_select %p24, 0, %s23
    %s26 = sadd.s32 1, %s17
    %s27 = scalar_select %p24, %s26, %s17
    %p28 = scmp.ge.s32.totalorder %s27, 2
    %s29 = scalar_select %p28, 0, %s27
    %s30 = ssub.s32 %s17, %s29
    %p31 = scmp.eq.s32.totalorder %s30, 0
    %s33 = sadd.s32 %s32, 1
    %s34 = scalar_select %p31, %s32, %s33
    %p37 = pneg %p31
    %p38 = scmp.eq.s32.totalorder %s10, 3
    %p39 = por %p37, %p38
    %p40 = scmp.ne.s32.totalorder %s32, %s35
    %p41 = scmp.eq.s32.totalorder %s10, 0
    %p42 = por %p40, %p41
    %p43 = scmp.ne.s32.totalorder %s32, %s35
    %p44 = scmp.eq.s32.totalorder %s15, 3
    %p45 = por %p43, %p44
    %p46 = scmp.ne.s32.totalorder %s35, %s36
    %p47 = scmp.eq.s32.totalorder %s15, 0
    %p48 = por %p46, %p47
    %p49 = scmp.ne.s32.totalorder %s35, %s36
    %p50 = scmp.eq.s32.totalorder %s16, 3
    %p51 = por %p49, %p50
    %p53 = scmp.ne.s32.totalorder %s36, %s52
    %p54 = scmp.eq.s32.totalorder %s16, 0
    %p55 = por %p53, %p54
    %s57 = sadd.s32 %s56, 1
    %p60 = scmp.eq.s32.totalorder %s10, 3
    %p61 = scmp.ne.s32.totalorder %s56, %s58
    %p62 = scmp.eq.s32.totalorder %s10, 0
    %p63 = por %p61, %p62
    %p64 = scmp.ne.s32.totalorder %s56, %s58
    %p65 = scmp.eq.s32.totalorder %s15, 3
    %p66 = por %p64, %p65
    %p67 = scmp.ne.s32.totalorder %s58, %s59
    %p68 = scmp.eq.s32.totalorder %s15, 0
    %p69 = por %p67, %p68
    %p70 = scmp.ne.s32.totalorder %s58, %s59
    %p71 = scmp.eq.s32.totalorder %s16, 3
    %p72 = por %p70, %p71
    %p74 = scmp.ne.s32.totalorder %s59, %s73
    %p75 = scmp.eq.s32.totalorder %s16, 0
    %p76 = por %p74, %p75
    %s78 = sadd.s32 %s77, 1
    %p81 = scmp.eq.s32.totalorder %s10, 3
    %p82 = scmp.ne.s32.totalorder %s77, %s79
    %p83 = scmp.eq.s32.totalorder %s10, 0
    %p84 = por %p82, %p83
    %p85 = scmp.ne.s32.totalorder %s77, %s79
    %p86 = scmp.eq.s32.totalorder %s15, 3
    %p87 = por %p85, %p86
    %p88 = scmp.ne.s32.totalorder %s79, %s80
    %p89 = scmp.eq.s32.totalorder %s15, 0
    %p90 = por %p88, %p89
    %p91 = scmp.ne.s32.totalorder %s79, %s80
    %p92 = scmp.eq.s32.totalorder %s16, 3
    %p93 = por %p91, %p92
    %p95 = scmp.ne.s32.totalorder %s80, %s94
    %p96 = scmp.eq.s32.totalorder %s16, 0
    %p97 = por %p95, %p96
    %s99 = sadd.s32 %s98, 1
    %p102 = scmp.eq.s32.totalorder %s10, 3
    %p103 = scmp.ne.s32.totalorder %s98, %s100
    %p104 = scmp.eq.s32.totalorder %s10, 0
    %p105 = por %p103, %p104
    %p106 = scmp.ne.s32.totalorder %s98, %s100
    %p107 = scmp.eq.s32.totalorder %s15, 3
    %p108 = por %p106, %p107
    %p109 = scmp.ne.s32.totalorder %s100, %s101
    %p110 = scmp.eq.s32.totalorder %s15, 0
    %p111 = por %p109, %p110
    %p112 = scmp.ne.s32.totalorder %s100, %s101
    %p113 = scmp.eq.s32.totalorder %s16, 3
    %p114 = por %p112, %p113
    %p116 = scmp.ne.s32.totalorder %s101, %s115
    %p117 = scmp.eq.s32.totalorder %s16, 0
    %p118 = por %p116, %p117
    %s119 = ssub.s32 %s17, %s29
    %s120 = ssub.s32 %s18, %s25
    %s121 = sor.u32 %s119, %s120
    %p122 = scmp.eq.s32.totalorder %s121, 0
    %s124 = sadd.s32 %s123, 1
    %s125 = scalar_select %p122, %s123, %s124
    %p128 = pneg %p122
    %p129 = scmp.eq.s32.totalorder %s10, 3
    %p130 = por %p128, %p129
    %p131 = scmp.ne.s32.totalorder %s123, %s126
    %p132 = scmp.eq.s32.totalorder %s10, 0
    %p133 = por %p131, %p132
    %p134 = scmp.ne.s32.totalorder %s123, %s126
    %p135 = scmp.eq.s32.totalorder %s15, 3
    %p136 = por %p134, %p135
    %p137 = scmp.ne.s32.totalorder %s126, %s127
    %p138 = scmp.eq.s32.totalorder %s15, 0
    %p139 = por %p137, %p138
    %p140 = scmp.ne.s32.totalorder %s126, %s127
    %p141 = scmp.eq.s32.totalorder %s16, 3
    %p142 = por %p140, %p141
    %p144 = scmp.ne.s32.totalorder %s127, %s143
    %p145 = scmp.eq.s32.totalorder %s16, 0
    %p146 = por %p144, %p145
    %p147 = scmp.le.s32.totalorder 1, %s10
    %p148 = scmp.lt.s32.totalorder %s10, 5
    %p149 = pnand %p147, %p148
    %p150 = pneg %p149
    // Predicated region
    $region9: #{conv_batch_norm.3} parent=5 // pred_check
      _
    $region10: #{conv_batch_norm.3} parent=5 // pred_check_branch
      %152 = sbr.rel (%p149) target = $region12
    $region11: #{conv_batch_norm.3} parent=5 // pred_region
      %s153 = ssub.s32 %s10, 1
      // Predicated region
      $region13: #{conv_batch_norm.3} parent=11 // pred_check
        %p154 = pneg %p69
      $region14: #{conv_batch_norm.3} parent=11 // pred_check_branch
        %156 = sbr.rel (%p154) target = $region16
      $region15: #{conv_batch_norm.3} parent=11 // pred_region
        _
      $region16: #{conv_batch_norm.3} parent=11 // pred_fallthru
        _
      // Predicated region
      $region17: #{conv_batch_norm.3} parent=11 // pred_check
        %p157 = pneg %p90
      $region18: #{conv_batch_norm.3} parent=11 // pred_check_branch
        %159 = sbr.rel (%p157) target = $region20
      $region19: #{conv_batch_norm.3} parent=11 // pred_region
        _
      $region20: #{conv_batch_norm.3} parent=11 // pred_fallthru
        _
      // Predicated region
      $region21: #{conv_batch_norm.3} parent=11 // pred_check
        %p160 = pneg %p111
      $region22: #{conv_batch_norm.3} parent=11 // pred_check_branch
        %162 = sbr.rel (%p160) target = $region24
      $region23: #{conv_batch_norm.3} parent=11 // pred_region
        _
      $region24: #{conv_batch_norm.3} parent=11 // pred_fallthru
        _
    $region12: #{conv_batch_norm.3} parent=5 // pred_fallthru
      _
    %p163 = scmp.lt.s32.totalorder %s10, 4
    // Predicated region
    $region25: #{conv_batch_norm.3} parent=5 // pred_check
      %p164 = pneg %p163
    $region26: #{conv_batch_norm.3} parent=5 // pred_check_branch
      %166 = sbr.rel (%p164) target = $region28
    $region27: #{conv_batch_norm.3} parent=5 // pred_region
      // Predicated region
      $region29: #{conv_batch_norm.3} parent=27 // pred_check
        %p167 = pneg %p42
      $region30: #{conv_batch_norm.3} parent=27 // pred_check_branch
        %169 = sbr.rel (%p167) target = $region32
      $region31: #{conv_batch_norm.3} parent=27 // pred_region
        %p170 = scmp.lt.s32.totalorder %s17, 1
        %s171 = scalar_select %p170, %s17, 1
        %s172 = smul.addr %s171, 54
        %s173 = smul.addr %s172, 4
        %s174 = scalar_lea.vmem %s0, %s173
      $region32: #{conv_batch_norm.3} parent=27 // pred_fallthru
        _
    $region28: #{conv_batch_norm.3} parent=5 // pred_fallthru
      _
    %p175 = scmp.le.s32.totalorder 1, %s10
    %p176 = scmp.lt.s32.totalorder %s10, 5
    %p177 = pnand %p175, %p176
    %p178 = pneg %p177
    // Predicated region
    $region33: #{conv_batch_norm.3} parent=5 // pred_check
      _
    $region34: #{conv_batch_norm.3} parent=5 // pred_check_branch
      %180 = sbr.rel (%p177) target = $region36
    $region35: #{conv_batch_norm.3} parent=5 // pred_region
      %s181 = ssub.s32 %s10, 1
      %p182 = scmp.lt.s32.totalorder %s19, 1
      %s183 = scalar_select %p182, %s19, 1
      %s184 = smul.addr %s183, 54
      %s185 = smul.addr %s184, 4
      %s186 = scalar_lea.vmem %s0, %s185
      %p187 = pneg %p48
      %p188 = pneg %p45
      %p189 = pneg %p69
      %p190 = pneg %p66
      %p191 = pneg %p90
      %p192 = pneg %p87
      %p193 = pneg %p111
      %p194 = pneg %p108
      %p195 = pneg %p139
      %p196 = pneg %p136
      %s197 = smul.u32 8, %s20
      %p198 = scmp.lt.s32.totalorder %s19, 1
      %s199 = scalar_select %p198, %s19, 1
      %p200 = scmp.lt.s32.totalorder %s197, 15
      %s201 = scalar_select %p200, %s197, 15
      %s202 = smul.addr %s201, 2
      %s203 = smul.addr %s199, 32
      %s204 = sadd.s32 %s202, %s203
      %s205 = smul.addr %s204, 4
      %s206 = scalar_lea.vmem %s4, %s205
      %p207 = scmp.lt.s32.totalorder %s19, 1
      %s208 = scalar_select %p207, %s19, 1
      %s209 = smul.addr %s208, 54
      %s210 = smul.addr %s209, 4
      %s211 = scalar_lea.vmem %s0, %s210
      %s212 = smul.u32 8, %s20
      %p213 = scmp.lt.s32.totalorder %s19, 1
      %s214 = scalar_select %p213, %s19, 1
      %p215 = scmp.lt.s32.totalorder %s212, 15
      %s216 = scalar_select %p215, %s212, 15
      %s217 = smul.addr %s216, 2
      %s218 = smul.addr %s214, 32
      %s219 = sadd.s32 %s217, %s218
      %s220 = smul.addr %s219, 4
      %s221 = scalar_lea.vmem %s4, %s220
      %s222 = smul.u32 8, %s20
      %s224 = smul.u32 %s20, 8
      %s225 = smul.u32 %s224, 3
      %s226 = smul.addr %s225, 4
      %s227 = scalar_lea.vmem %s211, %s226
      %v228 = vld [vmem:[%s227] sm:$0xf]
      %v229 = vld [vmem:[%s227 + $0x4] sm:$0xf]
      %v230 = vld [vmem:[%s227 + $0xc] sm:$0xf]
      %v231 = vld [vmem:[%s227 + $0x10] sm:$0xf]
      %v232 = vld [vmem:[%s227 + $0x18] sm:$0xf]
      %v233 = vld [vmem:[%s227 + $0x1c] sm:$0xf]
      %v234 = vld [vmem:[%s227 + $0x24] sm:$0xf]
      %v235 = vld [vmem:[%s227 + $0x28] sm:$0xf]
      %v236 = vld [vmem:[%s227 + $0x30] sm:$0xf]
      %v237 = vld [vmem:[%s227 + $0x34] sm:$0xf]
      %v238 = vld [vmem:[%s227 + $0x3c] sm:$0xf]
      %v239 = vld [vmem:[%s227 + $0x40] sm:$0xf]
      %v240 = vld [vmem:[%s227 + $0x48] sm:$0xf]
      %v241 = vld [vmem:[%s227 + $0x4c] sm:$0xf]
      %v242 = vld [vmem:[%s227 + $0x54] sm:$0xf]
      %v243 = vld [vmem:[%s227 + $0x58] sm:$0xf]
      %v244 = vld [vmem:[%s227 + $0x8] sm:$0x1]
      %v245 = vld [vmem:[%s227 + $0x14] sm:$0x1]
      %v246 = vld [vmem:[%s227 + $0x20] sm:$0x1]
      %v247 = vld [vmem:[%s227 + $0x2c] sm:$0x1]
      %v248 = vld [vmem:[%s227 + $0x38] sm:$0x1]
      %v249 = vld [vmem:[%s227 + $0x44] sm:$0x1]
      %v250 = vld [vmem:[%s227 + $0x50] sm:$0x1]
      %v251 = vld [vmem:[%s227 + $0x5c] sm:$0x1]
      %v252 = vld [vmem:[%s227] sm:$0xe]
      %v253 = vld [vmem:[%s227 + $0xc] sm:$0xe]
      %v254 = vld [vmem:[%s227 + $0x18] sm:$0xe]
      %v255 = vld [vmem:[%s227 + $0x24] sm:$0xe]
      %v256 = vld [vmem:[%s227 + $0x30] sm:$0xe]
      %v257 = vld [vmem:[%s227 + $0x3c] sm:$0xe]
      %v258 = vld [vmem:[%s227 + $0x48] sm:$0xe]
      %v259 = vld [vmem:[%s227 + $0x54] sm:$0xe]
      %s260 = sadd.s32 %s224, 1
      %s261 = smul.u32 %s260, 3
      %s262 = smul.addr %s261, 4
      %s263 = scalar_lea.vmem %s211, %s262
      %v264 = vld [vmem:[%s263] sm:$0xf]
      %v265 = vld [vmem:[%s263 + $0x4] sm:$0xf]
      %v266 = vld [vmem:[%s263 + $0xc] sm:$0xf]
      %v267 = vld [vmem:[%s263 + $0x10] sm:$0xf]
      %v268 = vld [vmem:[%s263 + $0x18] sm:$0xf]
      %v269 = vld [vmem:[%s263 + $0x1c] sm:$0xf]
      %v270 = vld [vmem:[%s263 + $0x24] sm:$0xf]
      %v271 = vld [vmem:[%s263 + $0x28] sm:$0xf]
      %v272 = vld [vmem:[%s263 + $0x30] sm:$0xf]
      %v273 = vld [vmem:[%s263 + $0x34] sm:$0xf]
      %v274 = vld [vmem:[%s263 + $0x3c] sm:$0xf]
      %v275 = vld [vmem:[%s263 + $0x40] sm:$0xf]
      %v276 = vld [vmem:[%s263 + $0x48] sm:$0xf]
      %v277 = vld [vmem:[%s263 + $0x4c] sm:$0xf]
      %v278 = vld [vmem:[%s263 + $0x54] sm:$0xf]
      %v279 = vld [vmem:[%s263 + $0x58] sm:$0xf]
      %v280 = vld [vmem:[%s263 + $0x8] sm:$0x1]
      %v281 = vld [vmem:[%s263 + $0x14] sm:$0x1]
      %v282 = vld [vmem:[%s263 + $0x20] sm:$0x1]
      %v283 = vld [vmem:[%s263 + $0x2c] sm:$0x1]
      %v284 = vld [vmem:[%s263 + $0x38] sm:$0x1]
      %v285 = vld [vmem:[%s263 + $0x44] sm:$0x1]
      %v286 = vld [vmem:[%s263 + $0x50] sm:$0x1]
      %v287 = vld [vmem:[%s263 + $0x5c] sm:$0x1]
      %v288 = vld [vmem:[%s263] sm:$0xe]
      %v289 = vld [vmem:[%s263 + $0xc] sm:$0xe]
      %v290 = vld [vmem:[%s263 + $0x18] sm:$0xe]
      %v291 = vld [vmem:[%s263 + $0x24] sm:$0xe]
      %v292 = vld [vmem:[%s263 + $0x30] sm:$0xe]
      %v293 = vld [vmem:[%s263 + $0x3c] sm:$0xe]
      %v294 = vld [vmem:[%s263 + $0x48] sm:$0xe]
      %v295 = vld [vmem:[%s263 + $0x54] sm:$0xe]
      %s296 = sadd.s32 %s224, 2
      %s297 = smul.u32 %s296, 3
      %s298 = smul.addr %s297, 4
      %s299 = scalar_lea.vmem %s211, %s298
      %v300 = vld [vmem:[%s299] sm:$0xf]
      %v301 = vld [vmem:[%s299 + $0x4] sm:$0xf]
      %v302 = vld [vmem:[%s299 + $0xc] sm:$0xf]
      %v303 = vld [vmem:[%s299 + $0x10] sm:$0xf]
      %v304 = vld [vmem:[%s299 + $0x18] sm:$0xf]
      %v305 = vld [vmem:[%s299 + $0x1c] sm:$0xf]
      %v306 = vld [vmem:[%s299 + $0x24] sm:$0xf]
      %v307 = vld [vmem:[%s299 + $0x28] sm:$0xf]
      %v308 = vld [vmem:[%s299 + $0x30] sm:$0xf]
      %v309 = vld [vmem:[%s299 + $0x34] sm:$0xf]
      %v310 = vld [vmem:[%s299 + $0x3c] sm:$0xf]
      %v311 = vld [vmem:[%s299 + $0x40] sm:$0xf]
      %v312 = vld [vmem:[%s299 + $0x48] sm:$0xf]
      %v313 = vld [vmem:[%s299 + $0x4c] sm:$0xf]
      %v314 = vld [vmem:[%s299 + $0x54] sm:$0xf]
      %v315 = vld [vmem:[%s299 + $0x58] sm:$0xf]
      %v316 = vld [vmem:[%s299 + $0x8] sm:$0x1]
      %v317 = vld [vmem:[%s299 + $0x14] sm:$0x1]
      %v318 = vld [vmem:[%s299 + $0x20] sm:$0x1]
      %v319 = vld [vmem:[%s299 + $0x2c] sm:$0x1]
      %v320 = vld [vmem:[%s299 + $0x38] sm:$0x1]
      %v321 = vld [vmem:[%s299 + $0x44] sm:$0x1]
      %v322 = vld [vmem:[%s299 + $0x50] sm:$0x1]
      %v323 = vld [vmem:[%s299 + $0x5c] sm:$0x1]
      %v324 = vld [vmem:[%s299] sm:$0xe]
      %v325 = vld [vmem:[%s299 + $0xc] sm:$0xe]
      %v326 = vld [vmem:[%s299 + $0x18] sm:$0xe]
      %v327 = vld [vmem:[%s299 + $0x24] sm:$0xe]
      %v328 = vld [vmem:[%s299 + $0x30] sm:$0xe]
      %v329 = vld [vmem:[%s299 + $0x3c] sm:$0xe]
      %v330 = vld [vmem:[%s299 + $0x48] sm:$0xe]
      %v331 = vld [vmem:[%s299 + $0x54] sm:$0xe]
      %v348 = vunpack.c.l.b16 %v228
      %v349 = vunpack.c.l.b16 %v229
      %v350 = vunpack.c.l.b16 %v230
      %v351 = vunpack.c.l.b16 %v231
      %v352 = vunpack.c.l.b16 %v232
      %v353 = vunpack.c.l.b16 %v233
      %v354 = vunpack.c.l.b16 %v234
      %v355 = vunpack.c.l.b16 %v235
      %v356 = vunpack.c.l.b16 %v236
      %v357 = vunpack.c.l.b16 %v237
      %v358 = vunpack.c.l.b16 %v238
      %v359 = vunpack.c.l.b16 %v239
      %v360 = vunpack.c.l.b16 %v240
      %v361 = vunpack.c.l.b16 %v241
      %v362 = vunpack.c.l.b16 %v242
      %v363 = vunpack.c.l.b16 %v243
      %v364 = vpack.c.b16 %v349, %v348
      %v365 = vpack.c.b16 %v351, %v350
      %v366 = vpack.c.b16 %v353, %v352
      %v367 = vpack.c.b16 %v355, %v354
      %v368 = vpack.c.b16 %v357, %v356
      %v369 = vpack.c.b16 %v359, %v358
      %v370 = vpack.c.b16 %v361, %v360
      %v371 = vpack.c.b16 %v363, %v362
      %v380 = vunpack.c.l.b16 %v244
      %v381 = vunpack.c.l.b16 %v245
      %v382 = vunpack.c.l.b16 %v246
      %v383 = vunpack.c.l.b16 %v247
      %v384 = vunpack.c.l.b16 %v248
      %v385 = vunpack.c.l.b16 %v249
      %v386 = vunpack.c.l.b16 %v250
      %v387 = vunpack.c.l.b16 %v251
      %v388 = vpack.c.b16 %v380, %v380
      %v389 = vpack.c.b16 %v381, %v381
      %v390 = vpack.c.b16 %v382, %v382
      %v391 = vpack.c.b16 %v383, %v383
      %v392 = vpack.c.b16 %v384, %v384
      %v393 = vpack.c.b16 %v385, %v385
      %v394 = vpack.c.b16 %v386, %v386
      %v395 = vpack.c.b16 %v387, %v387
      %vm396 = vsmask.f32 7424
      %v398 = vshrl.u32 %v364, 16
      %v400 = vshll.u32 %v364, 16
      %v402 = vrot.slane %v400, 1
      %v403 = vor.u32 %v398, %v402
      %v405 = vshll.u32 %v388, 16
      %v407 = vrot.slane %v405, 1
      %v408 = vsel %vm396, %v403, %v407
      %v410 = vshrl.u32 %v365, 16
      %v412 = vshll.u32 %v365, 16
      %v414 = vrot.slane %v412, 1
      %v415 = vor.u32 %v410, %v414
      %v417 = vshll.u32 %v389, 16
      %v419 = vrot.slane %v417, 1
      %v420 = vsel %vm396, %v415, %v419
      %v422 = vshrl.u32 %v366, 16
      %v424 = vshll.u32 %v366, 16
      %v426 = vrot.slane %v424, 1
      %v427 = vor.u32 %v422, %v426
      %v429 = vshll.u32 %v390, 16
      %v431 = vrot.slane %v429, 1
      %v432 = vsel %vm396, %v427, %v431
      %v434 = vshrl.u32 %v367, 16
      %v436 = vshll.u32 %v367, 16
      %v438 = vrot.slane %v436, 1
      %v439 = vor.u32 %v434, %v438
      %v441 = vshll.u32 %v391, 16
      %v443 = vrot.slane %v441, 1
      %v444 = vsel %vm396, %v439, %v443
      %v446 = vshrl.u32 %v368, 16
      %v448 = vshll.u32 %v368, 16
      %v450 = vrot.slane %v448, 1
      %v451 = vor.u32 %v446, %v450
      %v453 = vshll.u32 %v392, 16
      %v455 = vrot.slane %v453, 1
      %v456 = vsel %vm396, %v451, %v455
      %v458 = vshrl.u32 %v369, 16
      %v460 = vshll.u32 %v369, 16
      %v462 = vrot.slane %v460, 1
      %v463 = vor.u32 %v458, %v462
      %v465 = vshll.u32 %v393, 16
      %v467 = vrot.slane %v465, 1
      %v468 = vsel %vm396, %v463, %v467
      %v470 = vshrl.u32 %v370, 16
      %v472 = vshll.u32 %v370, 16
      %v474 = vrot.slane %v472, 1
      %v475 = vor.u32 %v470, %v474
      %v477 = vshll.u32 %v394, 16
      %v479 = vrot.slane %v477, 1
      %v480 = vsel %vm396, %v475, %v479
      %v482 = vshrl.u32 %v371, 16
      %v484 = vshll.u32 %v371, 16
      %v486 = vrot.slane %v484, 1
      %v487 = vor.u32 %v482, %v486
      %v489 = vshll.u32 %v395, 16
      %v491 = vrot.slane %v489, 1
      %v492 = vsel %vm396, %v487, %v491
      %493 = vrot.lane.b32.xlu0 %v408, 4
      %v494 = vpop.permute.xlu0 %493
      %495 = vrot.lane.b32.xlu0 %v420, 4
      %v496 = vpop.permute.xlu0 %495
      %497 = vrot.lane.b32.xlu0 %v432, 4
      %v498 = vpop.permute.xlu0 %497
      %499 = vrot.lane.b32.xlu0 %v444, 4
      %v500 = vpop.permute.xlu0 %499
      %501 = vrot.lane.b32.xlu0 %v456, 4
      %v502 = vpop.permute.xlu0 %501
      %503 = vrot.lane.b32.xlu0 %v468, 4
      %v504 = vpop.permute.xlu0 %503
      %505 = vrot.lane.b32.xlu0 %v480, 4
      %v506 = vpop.permute.xlu0 %505
      %507 = vrot.lane.b32.xlu0 %v492, 4
      %v508 = vpop.permute.xlu0 %507
      %v517 = vunpack.c.l.b16 %v252
      %v518 = vunpack.c.l.b16 %v253
      %v519 = vunpack.c.l.b16 %v254
      %v520 = vunpack.c.l.b16 %v255
      %v521 = vunpack.c.l.b16 %v256
      %v522 = vunpack.c.l.b16 %v257
      %v523 = vunpack.c.l.b16 %v258
      %v524 = vunpack.c.l.b16 %v259
      %v525 = vpack.c.b16 %v349, %v517
      %v526 = vpack.c.b16 %v351, %v518
      %v527 = vpack.c.b16 %v353, %v519
      %v528 = vpack.c.b16 %v355, %v520
      %v529 = vpack.c.b16 %v357, %v521
      %v530 = vpack.c.b16 %v359, %v522
      %v531 = vpack.c.b16 %v361, %v523
      %v532 = vpack.c.b16 %v363, %v524
      %vm533 = vcmask 1046528
      %v534 = vrot.slane %v525, 1
      %v535 = vrot.slane %v388, 1
      %v536 = vsel %vm533, %v534, %v535
      %v537 = vrot.slane %v526, 1
      %v538 = vrot.slane %v389, 1
      %v539 = vsel %vm533, %v537, %v538
      %v540 = vrot.slane %v527, 1
      %v541 = vrot.slane %v390, 1
      %v542 = vsel %vm533, %v540, %v541
      %v543 = vrot.slane %v528, 1
      %v544 = vrot.slane %v391, 1
      %v545 = vsel %vm533, %v543, %v544
      %v546 = vrot.slane %v529, 1
      %v547 = vrot.slane %v392, 1
      %v548 = vsel %vm533, %v546, %v547
      %v549 = vrot.slane %v530, 1
      %v550 = vrot.slane %v393, 1
      %v551 = vsel %vm533, %v549, %v550
      %v552 = vrot.slane %v531, 1
      %v553 = vrot.slane %v394, 1
      %v554 = vsel %vm533, %v552, %v553
      %v555 = vrot.slane %v532, 1
      %v556 = vrot.slane %v395, 1
      %v557 = vsel %vm533, %v555, %v556
      %558 = vrot.lane.b32.xlu0 %v536, 8
      %v559 = vpop.permute.xlu0 %558
      %560 = vrot.lane.b32.xlu0 %v539, 8
      %v561 = vpop.permute.xlu0 %560
      %562 = vrot.lane.b32.xlu0 %v542, 8
      %v563 = vpop.permute.xlu0 %562
      %564 = vrot.lane.b32.xlu0 %v545, 8
      %v565 = vpop.permute.xlu0 %564
      %566 = vrot.lane.b32.xlu0 %v548, 8
      %v567 = vpop.permute.xlu0 %566
      %568 = vrot.lane.b32.xlu0 %v551, 8
      %v569 = vpop.permute.xlu0 %568
      %570 = vrot.lane.b32.xlu0 %v554, 8
      %v571 = vpop.permute.xlu0 %570
      %572 = vrot.lane.b32.xlu0 %v557, 8
      %v573 = vpop.permute.xlu0 %572
      %v590 = vunpack.c.l.b16 %v264
      %v591 = vunpack.c.l.b16 %v265
      %v592 = vunpack.c.l.b16 %v266
      %v593 = vunpack.c.l.b16 %v267
      %v594 = vunpack.c.l.b16 %v268
      %v595 = vunpack.c.l.b16 %v269
      %v596 = vunpack.c.l.b16 %v270
      %v597 = vunpack.c.l.b16 %v271
      %v598 = vunpack.c.l.b16 %v272
      %v599 = vunpack.c.l.b16 %v273
      %v600 = vunpack.c.l.b16 %v274
      %v601 = vunpack.c.l.b16 %v275
      %v602 = vunpack.c.l.b16 %v276
      %v603 = vunpack.c.l.b16 %v277
      %v604 = vunpack.c.l.b16 %v278
      %v605 = vunpack.c.l.b16 %v279
      %v606 = vpack.c.b16 %v591, %v590
      %v607 = vpack.c.b16 %v593, %v592
      %v608 = vpack.c.b16 %v595, %v594
      %v609 = vpack.c.b16 %v597, %v596
      %v610 = vpack.c.b16 %v599, %v598
      %v611 = vpack.c.b16 %v601, %v600
      %v612 = vpack.c.b16 %v603, %v602
      %v613 = vpack.c.b16 %v605, %v604
      %614 = vrot.lane.b32.xlu0 %v606, 12
      %v615 = vpop.permute.xlu0 %614
      %616 = vrot.lane.b32.xlu0 %v607, 12
      %v617 = vpop.permute.xlu0 %616
      %618 = vrot.lane.b32.xlu0 %v608, 12
      %v619 = vpop.permute.xlu0 %618
      %620 = vrot.lane.b32.xlu0 %v609, 12
      %v621 = vpop.permute.xlu0 %620
      %622 = vrot.lane.b32.xlu0 %v610, 12
      %v623 = vpop.permute.xlu0 %622
      %624 = vrot.lane.b32.xlu0 %v611, 12
      %v625 = vpop.permute.xlu0 %624
      %626 = vrot.lane.b32.xlu0 %v612, 12
      %v627 = vpop.permute.xlu0 %626
      %628 = vrot.lane.b32.xlu0 %v613, 12
      %v629 = vpop.permute.xlu0 %628
      %v638 = vunpack.c.l.b16 %v280
      %v639 = vunpack.c.l.b16 %v281
      %v640 = vunpack.c.l.b16 %v282
      %v641 = vunpack.c.l.b16 %v283
      %v642 = vunpack.c.l.b16 %v284
      %v643 = vunpack.c.l.b16 %v285
      %v644 = vunpack.c.l.b16 %v286
      %v645 = vunpack.c.l.b16 %v287
      %v646 = vpack.c.b16 %v638, %v638
      %v647 = vpack.c.b16 %v639, %v639
      %v648 = vpack.c.b16 %v640, %v640
      %v649 = vpack.c.b16 %v641, %v641
      %v650 = vpack.c.b16 %v642, %v642
      %v651 = vpack.c.b16 %v643, %v643
      %v652 = vpack.c.b16 %v644, %v644
      %v653 = vpack.c.b16 %v645, %v645
      %v655 = vshrl.u32 %v606, 16
      %v657 = vshll.u32 %v606, 16
      %v659 = vrot.slane %v657, 1
      %v660 = vor.u32 %v655, %v659
      %v662 = vshll.u32 %v646, 16
      %v664 = vrot.slane %v662, 1
      %v665 = vsel %vm396, %v660, %v664
      %v667 = vshrl.u32 %v607, 16
      %v669 = vshll.u32 %v607, 16
      %v671 = vrot.slane %v669, 1
      %v672 = vor.u32 %v667, %v671
      %v674 = vshll.u32 %v647, 16
      %v676 = vrot.slane %v674, 1
      %v677 = vsel %vm396, %v672, %v676
      %v679 = vshrl.u32 %v608, 16
      %v681 = vshll.u32 %v608, 16
      %v683 = vrot.slane %v681, 1
      %v684 = vor.u32 %v679, %v683
      %v686 = vshll.u32 %v648, 16
      %v688 = vrot.slane %v686, 1
      %v689 = vsel %vm396, %v684, %v688
      %v691 = vshrl.u32 %v609, 16
      %v693 = vshll.u32 %v609, 16
      %v695 = vrot.slane %v693, 1
      %v696 = vor.u32 %v691, %v695
      %v698 = vshll.u32 %v649, 16
      %v700 = vrot.slane %v698, 1
      %v701 = vsel %vm396, %v696, %v700
      %v703 = vshrl.u32 %v610, 16
      %v705 = vshll.u32 %v610, 16
      %v707 = vrot.slane %v705, 1
      %v708 = vor.u32 %v703, %v707
      %v710 = vshll.u32 %v650, 16
      %v712 = vrot.slane %v710, 1
      %v713 = vsel %vm396, %v708, %v712
      %v715 = vshrl.u32 %v611, 16
      %v717 = vshll.u32 %v611, 16
      %v719 = vrot.slane %v717, 1
      %v720 = vor.u32 %v715, %v719
      %v722 = vshll.u32 %v651, 16
      %v724 = vrot.slane %v722, 1
      %v725 = vsel %vm396, %v720, %v724
      %v727 = vshrl.u32 %v612, 16
      %v729 = vshll.u32 %v612, 16
      %v731 = vrot.slane %v729, 1
      %v732 = vor.u32 %v727, %v731
      %v734 = vshll.u32 %v652, 16
      %v736 = vrot.slane %v734, 1
      %v737 = vsel %vm396, %v732, %v736
      %v739 = vshrl.u32 %v613, 16
      %v741 = vshll.u32 %v613, 16
      %v743 = vrot.slane %v741, 1
      %v744 = vor.u32 %v739, %v743
      %v746 = vshll.u32 %v653, 16
      %v748 = vrot.slane %v746, 1
      %v749 = vsel %vm396, %v744, %v748
      %750 = vrot.lane.b32.xlu0 %v665, 16
      %v751 = vpop.permute.xlu0 %750
      %752 = vrot.lane.b32.xlu0 %v677, 16
      %v753 = vpop.permute.xlu0 %752
      %754 = vrot.lane.b32.xlu0 %v689, 16
      %v755 = vpop.permute.xlu0 %754
      %756 = vrot.lane.b32.xlu0 %v701, 16
      %v757 = vpop.permute.xlu0 %756
      %758 = vrot.lane.b32.xlu0 %v713, 16
      %v759 = vpop.permute.xlu0 %758
      %760 = vrot.lane.b32.xlu0 %v725, 16
      %v761 = vpop.permute.xlu0 %760
      %762 = vrot.lane.b32.xlu0 %v737, 16
      %v763 = vpop.permute.xlu0 %762
      %764 = vrot.lane.b32.xlu0 %v749, 16
      %v765 = vpop.permute.xlu0 %764
      %v774 = vunpack.c.l.b16 %v288
      %v775 = vunpack.c.l.b16 %v289
      %v776 = vunpack.c.l.b16 %v290
      %v777 = vunpack.c.l.b16 %v291
      %v778 = vunpack.c.l.b16 %v292
      %v779 = vunpack.c.l.b16 %v293
      %v780 = vunpack.c.l.b16 %v294
      %v781 = vunpack.c.l.b16 %v295
      %v782 = vpack.c.b16 %v591, %v774
      %v783 = vpack.c.b16 %v593, %v775
      %v784 = vpack.c.b16 %v595, %v776
      %v785 = vpack.c.b16 %v597, %v777
      %v786 = vpack.c.b16 %v599, %v778
      %v787 = vpack.c.b16 %v601, %v779
      %v788 = vpack.c.b16 %v603, %v780
      %v789 = vpack.c.b16 %v605, %v781
      %v790 = vrot.slane %v782, 1
      %v791 = vrot.slane %v646, 1
      %v792 = vsel %vm533, %v790, %v791
      %v793 = vrot.slane %v783, 1
      %v794 = vrot.slane %v647, 1
      %v795 = vsel %vm533, %v793, %v794
      %v796 = vrot.slane %v784, 1
      %v797 = vrot.slane %v648, 1
      %v798 = vsel %vm533, %v796, %v797
      %v799 = vrot.slane %v785, 1
      %v800 = vrot.slane %v649, 1
      %v801 = vsel %vm533, %v799, %v800
      %v802 = vrot.slane %v786, 1
      %v803 = vrot.slane %v650, 1
      %v804 = vsel %vm533, %v802, %v803
      %v805 = vrot.slane %v787, 1
      %v806 = vrot.slane %v651, 1
      %v807 = vsel %vm533, %v805, %v806
      %v808 = vrot.slane %v788, 1
      %v809 = vrot.slane %v652, 1
      %v810 = vsel %vm533, %v808, %v809
      %v811 = vrot.slane %v789, 1
      %v812 = vrot.slane %v653, 1
      %v813 = vsel %vm533, %v811, %v812
      %814 = vrot.lane.b32.xlu0 %v792, 20
      %v815 = vpop.permute.xlu0 %814
      %816 = vrot.lane.b32.xlu0 %v795, 20
      %v817 = vpop.permute.xlu0 %816
      %818 = vrot.lane.b32.xlu0 %v798, 20
      %v819 = vpop.permute.xlu0 %818
      %820 = vrot.lane.b32.xlu0 %v801, 20
      %v821 = vpop.permute.xlu0 %820
      %822 = vrot.lane.b32.xlu0 %v804, 20
      %v823 = vpop.permute.xlu0 %822
      %824 = vrot.lane.b32.xlu0 %v807, 20
      %v825 = vpop.permute.xlu0 %824
      %826 = vrot.lane.b32.xlu0 %v810, 20
      %v827 = vpop.permute.xlu0 %826
      %828 = vrot.lane.b32.xlu0 %v813, 20
      %v829 = vpop.permute.xlu0 %828
      %v846 = vunpack.c.l.b16 %v300
      %v847 = vunpack.c.l.b16 %v301
      %v848 = vunpack.c.l.b16 %v302
      %v849 = vunpack.c.l.b16 %v303
      %v850 = vunpack.c.l.b16 %v304
      %v851 = vunpack.c.l.b16 %v305
      %v852 = vunpack.c.l.b16 %v306
      %v853 = vunpack.c.l.b16 %v307
      %v854 = vunpack.c.l.b16 %v308
      %v855 = vunpack.c.l.b16 %v309
      %v856 = vunpack.c.l.b16 %v310
      %v857 = vunpack.c.l.b16 %v311
      %v858 = vunpack.c.l.b16 %v312
      %v859 = vunpack.c.l.b16 %v313
      %v860 = vunpack.c.l.b16 %v314
      %v861 = vunpack.c.l.b16 %v315
      %v862 = vpack.c.b16 %v847, %v846
      %v863 = vpack.c.b16 %v849, %v848
      %v864 = vpack.c.b16 %v851, %v850
      %v865 = vpack.c.b16 %v853, %v852
      %v866 = vpack.c.b16 %v855, %v854
      %v867 = vpack.c.b16 %v857, %v856
      %v868 = vpack.c.b16 %v859, %v858
      %v869 = vpack.c.b16 %v861, %v860
      %870 = vrot.lane.b32.xlu0 %v862, 24
      %v871 = vpop.permute.xlu0 %870
      %872 = vrot.lane.b32.xlu0 %v863, 24
      %v873 = vpop.permute.xlu0 %872
      %874 = vrot.lane.b32.xlu0 %v864, 24
      %v875 = vpop.permute.xlu0 %874
      %876 = vrot.lane.b32.xlu0 %v865, 24
      %v877 = vpop.permute.xlu0 %876
      %878 = vrot.lane.b32.xlu0 %v866, 24
      %v879 = vpop.permute.xlu0 %878
      %880 = vrot.lane.b32.xlu0 %v867, 24
      %v881 = vpop.permute.xlu0 %880
      %882 = vrot.lane.b32.xlu0 %v868, 24
      %v883 = vpop.permute.xlu0 %882
      %884 = vrot.lane.b32.xlu0 %v869, 24
      %v885 = vpop.permute.xlu0 %884
      %v894 = vunpack.c.l.b16 %v316
      %v895 = vunpack.c.l.b16 %v317
      %v896 = vunpack.c.l.b16 %v318
      %v897 = vunpack.c.l.b16 %v319
      %v898 = vunpack.c.l.b16 %v320
      %v899 = vunpack.c.l.b16 %v321
      %v900 = vunpack.c.l.b16 %v322
      %v901 = vunpack.c.l.b16 %v323
      %v902 = vpack.c.b16 %v894, %v894
      %v903 = vpack.c.b16 %v895, %v895
      %v904 = vpack.c.b16 %v896, %v896
      %v905 = vpack.c.b16 %v897, %v897
      %v906 = vpack.c.b16 %v898, %v898
      %v907 = vpack.c.b16 %v899, %v899
      %v908 = vpack.c.b16 %v900, %v900
      %v909 = vpack.c.b16 %v901, %v901
      %v911 = vshrl.u32 %v862, 16
      %v913 = vshll.u32 %v862, 16
      %v915 = vrot.slane %v913, 1
      %v916 = vor.u32 %v911, %v915
      %v918 = vshll.u32 %v902, 16
      %v920 = vrot.slane %v918, 1
      %v921 = vsel %vm396, %v916, %v920
      %v923 = vshrl.u32 %v863, 16
      %v925 = vshll.u32 %v863, 16
      %v927 = vrot.slane %v925, 1
      %v928 = vor.u32 %v923, %v927
      %v930 = vshll.u32 %v903, 16
      %v932 = vrot.slane %v930, 1
      %v933 = vsel %vm396, %v928, %v932
      %v935 = vshrl.u32 %v864, 16
      %v937 = vshll.u32 %v864, 16
      %v939 = vrot.slane %v937, 1
      %v940 = vor.u32 %v935, %v939
      %v942 = vshll.u32 %v904, 16
      %v944 = vrot.slane %v942, 1
      %v945 = vsel %vm396, %v940, %v944
      %v947 = vshrl.u32 %v865, 16
      %v949 = vshll.u32 %v865, 16
      %v951 = vrot.slane %v949, 1
      %v952 = vor.u32 %v947, %v951
      %v954 = vshll.u32 %v905, 16
      %v956 = vrot.slane %v954, 1
      %v957 = vsel %vm396, %v952, %v956
      %v959 = vshrl.u32 %v866, 16
      %v961 = vshll.u32 %v866, 16
      %v963 = vrot.slane %v961, 1
      %v964 = vor.u32 %v959, %v963
      %v966 = vshll.u32 %v906, 16
      %v968 = vrot.slane %v966, 1
      %v969 = vsel %vm396, %v964, %v968
      %v971 = vshrl.u32 %v867, 16
      %v973 = vshll.u32 %v867, 16
      %v975 = vrot.slane %v973, 1
      %v976 = vor.u32 %v971, %v975
      %v978 = vshll.u32 %v907, 16
      %v980 = vrot.slane %v978, 1
      %v981 = vsel %vm396, %v976, %v980
      %v983 = vshrl.u32 %v868, 16
      %v985 = vshll.u32 %v868, 16
      %v987 = vrot.slane %v985, 1
      %v988 = vor.u32 %v983, %v987
      %v990 = vshll.u32 %v908, 16
      %v992 = vrot.slane %v990, 1
      %v993 = vsel %vm396, %v988, %v992
      %v995 = vshrl.u32 %v869, 16
      %v997 = vshll.u32 %v869, 16
      %v999 = vrot.slane %v997, 1
      %v1000 = vor.u32 %v995, %v999
      %v1002 = vshll.u32 %v909, 16
      %v1004 = vrot.slane %v1002, 1
      %v1005 = vsel %vm396, %v1000, %v1004
      %1006 = vrot.lane.b32.xlu0 %v921, 28
      %v1007 = vpop.permute.xlu0 %1006
      %1008 = vrot.lane.b32.xlu0 %v933, 28
      %v1009 = vpop.permute.xlu0 %1008
      %1010 = vrot.lane.b32.xlu0 %v945, 28
      %v1011 = vpop.permute.xlu0 %1010
      %1012 = vrot.lane.b32.xlu0 %v957, 28
      %v1013 = vpop.permute.xlu0 %1012
      %1014 = vrot.lane.b32.xlu0 %v969, 28
      %v1015 = vpop.permute.xlu0 %1014
      %1016 = vrot.lane.b32.xlu0 %v981, 28
      %v1017 = vpop.permute.xlu0 %1016
      %1018 = vrot.lane.b32.xlu0 %v993, 28
      %v1019 = vpop.permute.xlu0 %1018
      %1020 = vrot.lane.b32.xlu0 %v1005, 28
      %v1021 = vpop.permute.xlu0 %1020
      %v1030 = vunpack.c.l.b16 %v324
      %v1031 = vunpack.c.l.b16 %v325
      %v1032 = vunpack.c.l.b16 %v326
      %v1033 = vunpack.c.l.b16 %v327
      %v1034 = vunpack.c.l.b16 %v328
      %v1035 = vunpack.c.l.b16 %v329
      %v1036 = vunpack.c.l.b16 %v330
      %v1037 = vunpack.c.l.b16 %v331
      %v1038 = vpack.c.b16 %v847, %v1030
      %v1039 = vpack.c.b16 %v849, %v1031
      %v1040 = vpack.c.b16 %v851, %v1032
      %v1041 = vpack.c.b16 %v853, %v1033
      %v1042 = vpack.c.b16 %v855, %v1034
      %v1043 = vpack.c.b16 %v857, %v1035
      %v1044 = vpack.c.b16 %v859, %v1036
      %v1045 = vpack.c.b16 %v861, %v1037
      %v1046 = vrot.slane %v1038, 1
      %v1047 = vrot.slane %v902, 1
      %v1048 = vsel %vm533, %v1046, %v1047
      %v1049 = vrot.slane %v1039, 1
      %v1050 = vrot.slane %v903, 1
      %v1051 = vsel %vm533, %v1049, %v1050
      %v1052 = vrot.slane %v1040, 1
      %v1053 = vrot.slane %v904, 1
      %v1054 = vsel %vm533, %v1052, %v1053
      %v1055 = vrot.slane %v1041, 1
      %v1056 = vrot.slane %v905, 1
      %v1057 = vsel %vm533, %v1055, %v1056
      %v1058 = vrot.slane %v1042, 1
      %v1059 = vrot.slane %v906, 1
      %v1060 = vsel %vm533, %v1058, %v1059
      %v1061 = vrot.slane %v1043, 1
      %v1062 = vrot.slane %v907, 1
      %v1063 = vsel %vm533, %v1061, %v1062
      %v1064 = vrot.slane %v1044, 1
      %v1065 = vrot.slane %v908, 1
      %v1066 = vsel %vm533, %v1064, %v1065
      %v1067 = vrot.slane %v1045, 1
      %v1068 = vrot.slane %v909, 1
      %v1069 = vsel %vm533, %v1067, %v1068
      %1070 = vrot.lane.b32.xlu0 %v1048, 32
      %v1071 = vpop.permute.xlu0 %1070
      %1072 = vrot.lane.b32.xlu0 %v1051, 32
      %v1073 = vpop.permute.xlu0 %1072
      %1074 = vrot.lane.b32.xlu0 %v1054, 32
      %v1075 = vpop.permute.xlu0 %1074
      %1076 = vrot.lane.b32.xlu0 %v1057, 32
      %v1077 = vpop.permute.xlu0 %1076
      %1078 = vrot.lane.b32.xlu0 %v1060, 32
      %v1079 = vpop.permute.xlu0 %1078
      %1080 = vrot.lane.b32.xlu0 %v1063, 32
      %v1081 = vpop.permute.xlu0 %1080
      %1082 = vrot.lane.b32.xlu0 %v1066, 32
      %v1083 = vpop.permute.xlu0 %1082
      %1084 = vrot.lane.b32.xlu0 %v1069, 32
      %v1085 = vpop.permute.xlu0 %1084
      %vm1086 = vcmask 31744
      %v1088 = vsel %vm1086, %v364, %v494
      %v1090 = vsel %vm1086, %v365, %v496
      %v1092 = vsel %vm1086, %v366, %v498
      %v1094 = vsel %vm1086, %v367, %v500
      %v1096 = vsel %vm1086, %v368, %v502
      %v1098 = vsel %vm1086, %v369, %v504
      %v1100 = vsel %vm1086, %v370, %v506
      %v1102 = vsel %vm1086, %v371, %v508
      %vm1103 = vcmask 64512
      %v1105 = vsel %vm1103, %v1088, %v559
      %v1107 = vsel %vm1103, %v1090, %v561
      %v1109 = vsel %vm1103, %v1092, %v563
      %v1111 = vsel %vm1103, %v1094, %v565
      %v1113 = vsel %vm1103, %v1096, %v567
      %v1115 = vsel %vm1103, %v1098, %v569
      %v1117 = vsel %vm1103, %v1100, %v571
      %v1119 = vsel %vm1103, %v1102, %v573
      %vm1120 = vcmask 97280
      %v1122 = vsel %vm1120, %v1105, %v615
      %v1124 = vsel %vm1120, %v1107, %v617
      %v1126 = vsel %vm1120, %v1109, %v619
      %v1128 = vsel %vm1120, %v1111, %v621
      %v1130 = vsel %vm1120, %v1113, %v623
      %v1132 = vsel %vm1120, %v1115, %v625
      %v1134 = vsel %vm1120, %v1117, %v627
      %v1136 = vsel %vm1120, %v1119, %v629
      %vm1137 = vcmask 130048
      %v1139 = vsel %vm1137, %v1122, %v751
      %v1141 = vsel %vm1137, %v1124, %v753
      %v1143 = vsel %vm1137, %v1126, %v755
      %v1145 = vsel %vm1137, %v1128, %v757
      %v1147 = vsel %vm1137, %v1130, %v759
      %v1149 = vsel %vm1137, %v1132, %v761
      %v1151 = vsel %vm1137, %v1134, %v763
      %v1153 = vsel %vm1137, %v1136, %v765
      %vm1154 = vcmask 162816
      %v1156 = vsel %vm1154, %v1139, %v815
      %v1158 = vsel %vm1154, %v1141, %v817
      %v1160 = vsel %vm1154, %v1143, %v819
      %v1162 = vsel %vm1154, %v1145, %v821
      %v1164 = vsel %vm1154, %v1147, %v823
      %v1166 = vsel %vm1154, %v1149, %v825
      %v1168 = vsel %vm1154, %v1151, %v827
      %v1170 = vsel %vm1154, %v1153, %v829
      %vm1171 = vcmask 195584
      %v1173 = vsel %vm1171, %v1156, %v871
      %v1175 = vsel %vm1171, %v1158, %v873
      %v1177 = vsel %vm1171, %v1160, %v875
      %v1179 = vsel %vm1171, %v1162, %v877
      %v1181 = vsel %vm1171, %v1164, %v879
      %v1183 = vsel %vm1171, %v1166, %v881
      %v1185 = vsel %vm1171, %v1168, %v883
      %v1187 = vsel %vm1171, %v1170, %v885
      %vm1188 = vcmask 228352
      %v1190 = vsel %vm1188, %v1173, %v1007
      %v1192 = vsel %vm1188, %v1175, %v1009
      %v1194 = vsel %vm1188, %v1177, %v1011
      %v1196 = vsel %vm1188, %v1179, %v1013
      %v1198 = vsel %vm1188, %v1181, %v1015
      %v1200 = vsel %vm1188, %v1183, %v1017
      %v1202 = vsel %vm1188, %v1185, %v1019
      %v1204 = vsel %vm1188, %v1187, %v1021
      %vm1205 = vcmask 261120
      %v1207 = vsel %vm1205, %v1190, %v1071
      %v1209 = vsel %vm1205, %v1192, %v1073
      %v1211 = vsel %vm1205, %v1194, %v1075
      %v1213 = vsel %vm1205, %v1196, %v1077
      %v1215 = vsel %vm1205, %v1198, %v1079
      %v1217 = vsel %vm1205, %v1200, %v1081
      %v1219 = vsel %vm1205, %v1202, %v1083
      %v1221 = vsel %vm1205, %v1204, %v1085
      %v1222 = vld [vmem:[%s1] sm:$0xf]
      %v1223 = vld [vmem:[%s1 + $0x4] sm:$0xf]
      %v1224 = vld [vmem:[%s1 + $0x8] sm:$0xf]
      %v1225 = vld [vmem:[%s1 + $0xc] sm:$0xf]
      %v1226 = vld [vmem:[%s1 + $0x10] sm:$0x3]
      %v1232 = vunpack.c.l.b16 %v1222
      %v1233 = vunpack.c.l.b16 %v1223
      %v1234 = vunpack.c.l.b16 %v1224
      %v1235 = vunpack.c.l.b16 %v1225
      %v1236 = vunpack.c.l.b16 %v1226
      %v1237 = vpack.c.b16 %v1233, %v1232
      %v1238 = vpack.c.b16 %v1235, %v1234
      %v1239 = vpack.c.b16 %v1236, %v1236
      %vm1242 = vcmask 293888
      %v1243 = vsel %vm1242, %v1207, 0
      %v1245 = vsel %vm1242, %v1209, 0
      %v1247 = vsel %vm1242, %v1211, 0
      %v1249 = vsel %vm1242, %v1213, 0
      %v1251 = vsel %vm1242, %v1215, 0
      %v1253 = vsel %vm1242, %v1217, 0
      %v1255 = vsel %vm1242, %v1219, 0
      %v1257 = vsel %vm1242, %v1221, 0
      %vm1259 = vcmask 1041408
      %v1261 = vsel %vm1259, %v1239, 0
      %1263 = vmatprep.subr.bf16.mxu0 0
      %1264 = vmatpush1.bf16.msra.mxu0 %v1237
      %1265 = vmatprep.subr.bf16.mxu0 0
      %1266 = vmatpush1.bf16.msra.mxu0 %v1238
      %1267 = vmatprep.subr.bf16.mxu0 0
      %1268 = vmatpush1.bf16.msra.mxu0 %v1261
      %1269 = vmatprep.subr.bf16.mxu0 0
      %1270 = vmatpush1.bf16.msra.mxu0 0
      %1271 = vmatprep.subr.bf16.mxu0 0
      %1272 = vmatpush1.bf16.msra.mxu0 0
      %1273 = vmatprep.subr.bf16.mxu0 0
      %1274 = vmatpush1.bf16.msra.mxu0 0
      %1275 = vmatprep.subr.bf16.mxu0 0
      %1276 = vmatpush1.bf16.msra.mxu0 0
      %1277 = vmatprep.subr.bf16.mxu0 0
      %1278 = vmatpush1.bf16.msra.mxu0 0
      %1279 = vmatprep.subr.bf16.mxu0 0
      %1280 = vmatpush1.bf16.msra.mxu0 0
      %1281 = vmatprep.subr.bf16.mxu0 0
      %1282 = vmatpush1.bf16.msra.mxu0 0
      %1283 = vmatprep.subr.bf16.mxu0 0
      %1284 = vmatpush1.bf16.msra.mxu0 0
      %1285 = vmatprep.subr.bf16.mxu0 0
      %1286 = vmatpush1.bf16.msra.mxu0 0
      %1287 = vmatprep.subr.bf16.mxu0 0
      %1288 = vmatpush1.bf16.msra.mxu0 0
      %1289 = vmatprep.subr.bf16.mxu0 0
      %1290 = vmatpush1.bf16.msra.mxu0 0
      %1291 = vmatprep.subr.bf16.mxu0 0
      %1292 = vmatpush1.bf16.msra.mxu0 0
      %1293 = vmatprep.subr.bf16.mxu0 0
      %1294 = vmatpush1.bf16.msra.mxu0 0
      %1295 = vmatprep.mubr.bf16.mxu0 0
      %1296 = vmatmul.mubr.bf16.gmra.mrb[0].mxu0 %v1243
      %v1297 = vpop.f32.mrb[0].mxu0
      %v1298 = vadd.f32 0.0, %v1297
      %v1299 = vpop.f32.mrb[0].mxu0
      %v1300 = vpop.f32.mrb[0].mxu0
      %v1301 = vadd.f32 0.0, %v1300
      %v1302 = vpop.f32.mrb[0].mxu0
      %1303 = vmatprep.mubr.bf16.mxu0 0
      %1304 = vmatmul.mubr.bf16.gmra.mrb[0].mxu0 %v1245
      %v1305 = vpop.f32.mrb[0].mxu0
      %v1306 = vadd.f32 0.0, %v1305
      %v1307 = vpop.f32.mrb[0].mxu0
      %v1308 = vpop.f32.mrb[0].mxu0
      %v1309 = vadd.f32 0.0, %v1308
      %v1310 = vpop.f32.mrb[0].mxu0
      %1311 = vmatprep.mubr.bf16.mxu0 0
      %1312 = vmatmul.mubr.bf16.gmra.mrb[0].mxu0 %v1247
      %v1313 = vpop.f32.mrb[0].mxu0
      %v1314 = vadd.f32 0.0, %v1313
      %v1315 = vpop.f32.mrb[0].mxu0
      %v1316 = vpop.f32.mrb[0].mxu0
      %v1317 = vadd.f32 0.0, %v1316
      %v1318 = vpop.f32.mrb[0].mxu0
      %1319 = vmatprep.mubr.bf16.mxu0 0
      %1320 = vmatmul.mubr.bf16.gmra.mrb[0].mxu0 %v1249
      %v1321 = vpop.f32.mrb[0].mxu0
      %v1322 = vadd.f32 0.0, %v1321
      %v1323 = vpop.f32.mrb[0].mxu0
      %v1324 = vpop.f32.mrb[0].mxu0
      %v1325 = vadd.f32 0.0, %v1324
      %v1326 = vpop.f32.mrb[0].mxu0
      %1327 = vmatprep.mubr.bf16.mxu0 0
      %1328 = vmatmul.mubr.bf16.gmra.mrb[0].mxu0 %v1251
      %v1329 = vpop.f32.mrb[0].mxu0
      %v1330 = vadd.f32 0.0, %v1329
      %v1331 = vpop.f32.mrb[0].mxu0
      %v1332 = vpop.f32.mrb[0].mxu0
      %v1333 = vadd.f32 0.0, %v1332
      %v1334 = vpop.f32.mrb[0].mxu0
      %1335 = vmatprep.mubr.bf16.mxu0 0
      %1336 = vmatmul.mubr.bf16.gmra.mrb[0].mxu0 %v1253
      %v1337 = vpop.f32.mrb[0].mxu0
      %v1338 = vadd.f32 0.0, %v1337
      %v1339 = vpop.f32.mrb[0].mxu0
      %v1340 = vpop.f32.mrb[0].mxu0
      %v1341 = vadd.f32 0.0, %v1340
      %v1342 = vpop.f32.mrb[0].mxu0
      %1343 = vmatprep.mubr.bf16.mxu0 0
      %1344 = vmatmul.mubr.bf16.gmra.mrb[0].mxu0 %v1255
      %v1345 = vpop.f32.mrb[0].mxu0
      %v1346 = vadd.f32 0.0, %v1345
      %v1347 = vpop.f32.mrb[0].mxu0
      %v1348 = vpop.f32.mrb[0].mxu0
      %v1349 = vadd.f32 0.0, %v1348
      %v1350 = vpop.f32.mrb[0].mxu0
      %1351 = vmatprep.mubr.bf16.mxu0 0
      %1352 = vmatmul.mubr.bf16.gmra.mrb[0].mxu0 %v1257
      %v1353 = vpop.f32.mrb[0].mxu0
      %v1354 = vadd.f32 0.0, %v1353
      %v1355 = vpop.f32.mrb[0].mxu0
      %v1356 = vpop.f32.mrb[0].mxu0
      %v1357 = vadd.f32 0.0, %v1356
      %v1358 = vpop.f32.mrb[0].mxu0
      %1359 = vdwg.mxu0
      %v1360 = vld [vmem:[%s2] sm:$0x1]
      %v1362 = vlaneseq
      %v1363 = vshrl.u32 %v1362, 7
      %v1364 = vsub.s32 0, %v1363
      %v1365 = vrot.slane %v1360, %v1364
      %v1367 = vmul.f32 %v1298, %v1365
      %v1368 = vmul.f32 %v1301, %v1365
      %v1369 = vmul.f32 %v1306, %v1365
      %v1370 = vmul.f32 %v1309, %v1365
      %v1371 = vmul.f32 %v1314, %v1365
      %v1372 = vmul.f32 %v1317, %v1365
      %v1373 = vmul.f32 %v1322, %v1365
      %v1374 = vmul.f32 %v1325, %v1365
      %v1375 = vmul.f32 %v1330, %v1365
      %v1376 = vmul.f32 %v1333, %v1365
      %v1377 = vmul.f32 %v1338, %v1365
      %v1378 = vmul.f32 %v1341, %v1365
      %v1379 = vmul.f32 %v1346, %v1365
      %v1380 = vmul.f32 %v1349, %v1365
      %v1381 = vmul.f32 %v1354, %v1365
      %v1382 = vmul.f32 %v1357, %v1365
      %v1383 = vld [vmem:[%s3] sm:$0x1]
      %v1385 = vlaneseq
      %v1386 = vshrl.u32 %v1385, 7
      %v1387 = vsub.s32 0, %v1386
      %v1388 = vrot.slane %v1383, %v1387
      %v1390 = vadd.f32 %v1367, %v1388
      %v1391 = vadd.f32 %v1368, %v1388
      %v1392 = vadd.f32 %v1369, %v1388
      %v1393 = vadd.f32 %v1370, %v1388
      %v1394 = vadd.f32 %v1371, %v1388
      %v1395 = vadd.f32 %v1372, %v1388
      %v1396 = vadd.f32 %v1373, %v1388
      %v1397 = vadd.f32 %v1374, %v1388
      %v1398 = vadd.f32 %v1375, %v1388
      %v1399 = vadd.f32 %v1376, %v1388
      %v1400 = vadd.f32 %v1377, %v1388
      %v1401 = vadd.f32 %v1378, %v1388
      %v1402 = vadd.f32 %v1379, %v1388
      %v1403 = vadd.f32 %v1380, %v1388
      %v1404 = vadd.f32 %v1381, %v1388
      %v1405 = vadd.f32 %v1382, %v1388
      %v1406 = vmax.f32 %v1390, 0.0
      %v1407 = vmax.f32 %v1391, 0.0
      %v1408 = vmax.f32 %v1392, 0.0
      %v1409 = vmax.f32 %v1393, 0.0
      %v1410 = vmax.f32 %v1394, 0.0
      %v1411 = vmax.f32 %v1395, 0.0
      %v1412 = vmax.f32 %v1396, 0.0
      %v1413 = vmax.f32 %v1397, 0.0
      %v1414 = vmax.f32 %v1398, 0.0
      %v1415 = vmax.f32 %v1399, 0.0
      %v1416 = vmax.f32 %v1400, 0.0
      %v1417 = vmax.f32 %v1401, 0.0
      %v1418 = vmax.f32 %v1402, 0.0
      %v1419 = vmax.f32 %v1403, 0.0
      %v1420 = vmax.f32 %v1404, 0.0
      %v1421 = vmax.f32 %v1405, 0.0
      %v1422 = vpack.c.bf16 %v1407, %v1406
      %v1423 = vpack.c.bf16 %v1409, %v1408
      %v1424 = vpack.c.bf16 %v1411, %v1410
      %v1425 = vpack.c.bf16 %v1413, %v1412
      %v1426 = vpack.c.bf16 %v1415, %v1414
      %v1427 = vpack.c.bf16 %v1417, %v1416
      %v1428 = vpack.c.bf16 %v1419, %v1418
      %v1429 = vpack.c.bf16 %v1421, %v1420
      %v1438 = vunpack.c.l.b16 %v1422
      %v1439 = vunpack.c.h.b16 %v1422
      %v1440 = vunpack.c.l.b16 %v1423
      %v1441 = vunpack.c.h.b16 %v1423
      %v1442 = vunpack.c.l.b16 %v1424
      %v1443 = vunpack.c.h.b16 %v1424
      %v1444 = vunpack.c.l.b16 %v1425
      %v1445 = vunpack.c.h.b16 %v1425
      %v1446 = vunpack.c.l.b16 %v1426
      %v1447 = vunpack.c.h.b16 %v1426
      %v1448 = vunpack.c.l.b16 %v1427
      %v1449 = vunpack.c.h.b16 %v1427
      %v1450 = vunpack.c.l.b16 %v1428
      %v1451 = vunpack.c.h.b16 %v1428
      %v1452 = vunpack.c.l.b16 %v1429
      %v1453 = vunpack.c.h.b16 %v1429
      %v1454 = vpack.c.b16 %v1438, %v1438
      %v1455 = vpack.c.b16 %v1439, %v1439
      %v1456 = vpack.c.b16 %v1440, %v1440
      %v1457 = vpack.c.b16 %v1441, %v1441
      %v1458 = vpack.c.b16 %v1442, %v1442
      %v1459 = vpack.c.b16 %v1443, %v1443
      %v1460 = vpack.c.b16 %v1444, %v1444
      %v1461 = vpack.c.b16 %v1445, %v1445
      %v1462 = vpack.c.b16 %v1446, %v1446
      %v1463 = vpack.c.b16 %v1447, %v1447
      %v1464 = vpack.c.b16 %v1448, %v1448
      %v1465 = vpack.c.b16 %v1449, %v1449
      %v1466 = vpack.c.b16 %v1450, %v1450
      %v1467 = vpack.c.b16 %v1451, %v1451
      %v1468 = vpack.c.b16 %v1452, %v1452
      %v1469 = vpack.c.b16 %v1453, %v1453
      %1486 = vst [vmem:[%s221] sm:$0xf] %v1454
      %1487 = vst [vmem:[%s221 + $0x4] sm:$0xf] %v1455
      %1488 = vst [vmem:[%s221 + $0x8] sm:$0xf] %v1456
      %1489 = vst [vmem:[%s221 + $0xc] sm:$0xf] %v1457
      %1490 = vst [vmem:[%s221 + $0x10] sm:$0xf] %v1458
      %1491 = vst [vmem:[%s221 + $0x14] sm:$0xf] %v1459
      %1492 = vst [vmem:[%s221 + $0x18] sm:$0xf] %v1460
      %1493 = vst [vmem:[%s221 + $0x1c] sm:$0xf] %v1461
      %1494 = vst [vmem:[%s221 + $0x20] sm:$0xf] %v1462
      %1495 = vst [vmem:[%s221 + $0x24] sm:$0xf] %v1463
      %1496 = vst [vmem:[%s221 + $0x28] sm:$0xf] %v1464
      %1497 = vst [vmem:[%s221 + $0x2c] sm:$0xf] %v1465
      %1498 = vst [vmem:[%s221 + $0x30] sm:$0xf] %v1466
      %1499 = vst [vmem:[%s221 + $0x34] sm:$0xf] %v1467
      %1500 = vst [vmem:[%s221 + $0x38] sm:$0xf] %v1468
      %1501 = vst [vmem:[%s221 + $0x3c] sm:$0xf] %v1469
      %s1502 = smul.u32 8, %s20
      %p1503 = scmp.lt.s32.totalorder %s19, 1
      %s1504 = scalar_select %p1503, %s19, 1
      %p1505 = scmp.lt.s32.totalorder %s1502, 15
      %s1506 = scalar_select %p1505, %s1502, 15
      %s1507 = smul.addr %s1506, 2
      %s1508 = smul.addr %s1504, 32
      %s1509 = sadd.s32 %s1507, %s1508
      %s1510 = smul.addr %s1509, 4
      %s1511 = scalar_lea.vmem %s4, %s1510
      // Predicated region
      $region37: #{conv_batch_norm.3} parent=35 // pred_check
        %p1512 = pneg %p136
      $region38: #{conv_batch_norm.3} parent=35 // pred_check_branch
        %1514 = sbr.rel (%p1512) target = $region40
      $region39: #{conv_batch_norm.3} parent=35 // pred_region
        %s1515 = smul.u32 8, %s20
      $region40: #{conv_batch_norm.3} parent=35 // pred_fallthru
        _
    $region36: #{conv_batch_norm.3} parent=5 // pred_fallthru
      _
    %p1516 = scmp.le.s32.totalorder 2, %s10
    // Predicated region
    $region41: #{conv_batch_norm.3} parent=5 // pred_check
      %p1517 = pneg %p1516
    $region42: #{conv_batch_norm.3} parent=5 // pred_check_branch
      %1519 = sbr.rel (%p1517) target = $region44
    $region43: #{conv_batch_norm.3} parent=5 // pred_region
      %s1520 = ssub.s32 %s10, 2
      // Predicated region
      $region45: #{conv_batch_norm.3} parent=43 // pred_check
        %p1521 = pneg %p142
      $region46: #{conv_batch_norm.3} parent=43 // pred_check_branch
        %1523 = sbr.rel (%p1521) target = $region48
      $region47: #{conv_batch_norm.3} parent=43 // pred_region
        %s1524 = smul.u32 8, %s22
        %p1525 = scmp.lt.s32.totalorder %s21, 1
        %s1526 = scalar_select %p1525, %s21, 1
        %p1527 = scmp.lt.s32.totalorder %s1524, 15
        %s1528 = scalar_select %p1527, %s1524, 15
        %s1529 = smul.addr %s1528, 2
        %s1530 = smul.addr %s1526, 32
        %s1531 = sadd.s32 %s1529, %s1530
        %s1532 = smul.addr %s1531, 4
        %s1533 = scalar_lea.vmem %s4, %s1532
      $region48: #{conv_batch_norm.3} parent=43 // pred_fallthru
        _
    $region44: #{conv_batch_norm.3} parent=5 // pred_fallthru
      _
  $region6: #{conv_batch_norm.3} parent=0 // loop_footer
    %s14 = sadd.s32 1, %s10
  $region7: #{conv_batch_norm.3} parent=0 // loop_footer_branch
    %9 = sbr.rel target = $region3
  $region8: #{conv_batch_norm.3} parent=0 // loop_exit
    _

</llo_original>
